<compile_context>
chip_gen: v6e
topology: v6e:2x2x1
jax: 0.10.0
libtpu: 0.0.40
codegen_flags: <defaults>
</compile_context>

<pallas_src>
import numpy as np
import jax
import jax.numpy as jnp
from jax.experimental import pallas as pl
from jax.experimental.pallas import tpu as pltpu

LANE = 128


def _round_up(v, m):
    return ((v + m - 1) // m) * m


def cnn_kernel(rows_ref, wconv_ref, bconv_ref, wlin_ref, blin_ref, out_ref):
    """One batch tile; everything lane-dense (last dims are multiples of 128).

    rows_ref  : (TB, L, KE_pad)   bf16  im2col windows (window t = emb[t : t+KH] flattened on lanes)
    wconv_ref : (KE_pad, C_pad)   bf16  conv weight, row k*E+e = W[c, 0, k, e], zero-padded
    bconv_ref : (1, C_pad)        f32   conv bias (zero-padded)
    wlin_ref  : (C_pad, NL_pad)   bf16  linear weight (transposed, zero-padded)
    blin_ref  : (1, NL_pad)       f32   linear bias (zero-padded)
    out_ref   : (TB, NL_pad)      f32   logits (lane-dense; sliced to n_labels outside)
    """
    # Conv2d(KH x E) == a single matmul over the im2col'd K axis (K = KH*E zero-padded to 128).
    conv = jax.lax.dot_general(
        rows_ref[...], wconv_ref[...],
        dimension_numbers=(((2,), (0,)), ((), ())),
        preferred_element_type=jnp.float32)                   # (TB, L, C_pad) f32
    conv = conv + bconv_ref[0][None, None, :]

    # ReLU then global max-pool over the L conv positions (padded channel lanes stay exactly 0).
    act = jnp.maximum(conv, 0.0)
    pooled = jnp.max(act, axis=1)                              # (TB, C_pad)

    # Dropout(0.3) is identity at inference.  Linear head (second MXU matmul, lane-dense output).
    logits = jnp.dot(pooled.astype(wlin_ref.dtype), wlin_ref[...],
                     preferred_element_type=jnp.float32) + blin_ref[0][None, :]
    out_ref[...] = logits.astype(out_ref.dtype)


def cnn_forward(x, emb_weight, conv_w, conv_b, lin_w, lin_b,
                padding_idx, kernel_heights, batch_tile=128):
    """Glue: bf16 im2col gather, lane-dense weight packing, batch-tiled pallas_call."""
    B, S = x.shape
    vocab, E = emb_weight.shape
    C = conv_w.shape[0]
    NL = lin_w.shape[0]
    KH = int(kernel_heights)
    # NOTE: the original module literally uses padding=(padding_idx, 0) on the Conv2d.
    pad = int(padding_idx)

    S_c = S + 2 * pad                  # conv input length (zero rows top/bottom)
    L = S_c - KH + 1                   # conv output length (stride = 1)
    KE = KH * E
    KE_pad = _round_up(max(KE, LANE), LANE)
    C_pad = _round_up(max(C, LANE), LANE)
    NL_pad = _round_up(max(NL, LANE), LANE)

    # ---- batch tile: as large as a v7x-safe VMEM budget allows; even step count for megacore ----
    w_bytes = (KE_pad * C_pad + C_pad * NL_pad) * 2 + (C_pad + NL_pad) * 4
    per_row = 2 * (L * KE_pad * 2) + L * C_pad * 4 + C_pad * 4 + 2 * (NL_pad * 4)
    budget = 40 * 1024 * 1024
    max_tb = max(8, ((budget - 2 * w_bytes) // per_row) // 8 * 8)
    TB = min(int(batch_tile), B, max_tb)
    num_bt = pl.cdiv(B, TB)
    if num_bt > 1 and num_bt % 2 == 1:                 # v7x has 2 TCs: prefer an even step count
        num_bt += 1
        TB = max(8, _round_up(-(-B // num_bt), 8))
        num_bt = pl.cdiv(B, TB)
    B_pad = num_bt * TB

    # ---- fused pad + im2col embedding gather, bf16 table (cast BEFORE the gather) ----
    # A zero row is appended to the table; conv zero-padding positions and padded batch rows index it.
    emb_ext = jnp.concatenate(
        [emb_weight.astype(jnp.bfloat16), jnp.zeros((1, E), jnp.bfloat16)], axis=0)
    x_p = jnp.pad(x.astype(jnp.int32), ((0, B_pad - B), (pad, pad)), constant_values=vocab)
    pieces = [jnp.take(emb_ext, x_p[:, k:k + L], axis=0) for k in range(KH)]   # KH x (B_pad, L, E)
    if KE_pad > KE:
        pieces.append(jnp.zeros((B_pad, L, KE_pad - KE), jnp.bfloat16))
    rows = jnp.concatenate(pieces, axis=-1)            # (B_pad, L, KE_pad) bf16, lane-dense

    # ---- lane-dense MXU weights (bf16 operands, f32 biases) ----
    w = jnp.transpose(conv_w[:, 0, :, :], (1, 2, 0)).reshape(KE, C)   # row k*E+e <- W[c, 0, k, e]
    wconv = (jnp.zeros((KE_pad, C_pad), jnp.float32)
             .at[:KE, :C].set(w.astype(jnp.float32))).astype(jnp.bfloat16)
    bconv = jnp.zeros((1, C_pad), jnp.float32).at[0, :C].set(conv_b.astype(jnp.float32))
    wlin = (jnp.zeros((C_pad, NL_pad), jnp.float32)
            .at[:C, :NL].set(lin_w.T.astype(jnp.float32))).astype(jnp.bfloat16)
    blin = jnp.zeros((1, NL_pad), jnp.float32).at[0, :NL].set(lin_b.astype(jnp.float32))

    # VMEM budget: double-buffered rows/out blocks + f32 conv temp + pooled + weights, <= 48 MiB.
    need = (2 * TB * L * KE_pad * 2 + TB * L * C_pad * 4 + TB * C_pad * 4
            + 2 * TB * NL_pad * 4 + 2 * w_bytes)
    vmem_limit = int(min(max(2 * need, 32 * 1024 * 1024), 48 * 1024 * 1024))

    out = pl.pallas_call(
        cnn_kernel,
        out_shape=jax.ShapeDtypeStruct((B_pad, NL_pad), jnp.float32),
        grid=(num_bt,),
        in_specs=[
            pl.BlockSpec((TB, L, KE_pad), lambda i: (i, 0, 0)),
            pl.BlockSpec((KE_pad, C_pad), lambda i: (0, 0)),
            pl.BlockSpec((1, C_pad), lambda i: (0, 0)),
            pl.BlockSpec((C_pad, NL_pad), lambda i: (0, 0)),
            pl.BlockSpec((1, NL_pad), lambda i: (0, 0)),
        ],
        out_specs=pl.BlockSpec((TB, NL_pad), lambda i: (i, 0)),
        compiler_params=pltpu.CompilerParams(
            dimension_semantics=("parallel",),         # batch shards across TCs on v7x megacore
            vmem_limit_bytes=vmem_limit,
        ),
    )(rows, wconv, bconv, wlin, blin)

    return out[:B, :NL]


def reference_forward(x, emb_weight, conv_w, conv_b, lin_w, lin_b,
                      padding_idx, kernel_heights):
    """Pure-JAX f32 reference reproducing the PyTorch forward (dropout = identity)."""
    emb = jnp.take(emb_weight.astype(jnp.float32), x, axis=0)        # (B, S, E)
    pad = int(padding_idx)
    emb_p = jnp.pad(emb, ((0, 0), (pad, pad), (0, 0)))
    B, S_pad, E = emb_p.shape
    L = S_pad - kernel_heights + 1
    conv = jnp.zeros((B, L, conv_w.shape[0]), jnp.float32)
    for k in range(kernel_heights):
        conv = conv + jnp.einsum('ble,ce->blc',
                                 emb_p[:, k:k + L, :], conv_w[:, 0, k, :])
    conv = conv + conv_b[None, None, :]
    act = jnp.maximum(conv, 0.0)
    pooled = jnp.max(act, axis=1)
    return pooled @ lin_w.T + lin_b[None, :]


if __name__ == "__main__":
    # Small, deterministic configuration consistent with the module's forward.
    vocab_size = 50
    padding_idx = 1
    out_channels = 16
    emb_size = 32
    kernel_heights = 3
    n_labels = 4
    B, S = 256, 8            # B=256 with batch_tile=128 -> an even 2-step batch grid

    key = jax.random.PRNGKey(0)
    k_emb, k_cw, k_cb, k_lw, k_lb, k_x = jax.random.split(key, 6)

    emb_weight = 0.1 * jax.random.normal(k_emb, (vocab_size, emb_size), jnp.float32)
    emb_weight = emb_weight.at[padding_idx].set(0.0)                 # padding_idx row is zero
    conv_w = 0.1 * jax.random.normal(k_cw, (out_channels, 1, kernel_heights, emb_size), jnp.float32)
    conv_b = 0.1 * jax.random.normal(k_cb, (out_channels,), jnp.float32)
    lin_w = 0.1 * jax.random.normal(k_lw, (n_labels, out_channels), jnp.float32)
    lin_b = 0.1 * jax.random.normal(k_lb, (n_labels,), jnp.float32)

    x = jax.random.randint(k_x, (B, S), 0, vocab_size, jnp.int32)

    out = cnn_forward(x, emb_weight, conv_w, conv_b, lin_w, lin_b,
                      padding_idx, kernel_heights, batch_tile=128)
    out = jax.block_until_ready(out)

    ref = reference_forward(x, emb_weight, conv_w, conv_b, lin_w, lin_b,
                            padding_idx, kernel_heights)
    # bf16 matmul operands with f32 accumulation -> slightly relaxed tolerance vs pure-f32 ref.
    np.testing.assert_allclose(np.asarray(out), np.asarray(ref), rtol=2e-2, atol=2e-2)

    print("KERNEL_OK")
</pallas_src>

<mosaic_0001>
module attributes {stable_mosaic.version = 11 : i64} {
  func.func @cnn_kernel(%arg0: i32, %arg1: memref<128x8x128xbf16, #tpu.memory_space<vmem>>, %arg2: memref<128x128xbf16, #tpu.memory_space<vmem>>, %arg3: memref<1x128xf32, #tpu.memory_space<vmem>>, %arg4: memref<128x128xbf16, #tpu.memory_space<vmem>>, %arg5: memref<1x128xf32, #tpu.memory_space<vmem>>, %arg6: memref<128x128xf32, #tpu.memory_space<vmem>>) attributes {dimension_semantics = [#tpu.dimension_semantics<parallel>], iteration_bounds = array<i64: 2>, scalar_prefetch = 0 : i64, scratch_operands = 0 : i64, tpu.core_type = #tpu.core_type<tc>, window_params = [{transform_indices = @transform_0, window_bounds = array<i64: 128, 8, 128>}, {pipeline_mode = #tpu.pipeline_mode<synchronous>, transform_indices = @transform_1, window_bounds = array<i64: 128, 128>}, {pipeline_mode = #tpu.pipeline_mode<synchronous>, transform_indices = @transform_2, window_bounds = array<i64: 1, 128>}, {pipeline_mode = #tpu.pipeline_mode<synchronous>, transform_indices = @transform_3, window_bounds = array<i64: 128, 128>}, {pipeline_mode = #tpu.pipeline_mode<synchronous>, transform_indices = @transform_4, window_bounds = array<i64: 1, 128>}, {transform_indices = @transform_5, window_bounds = array<i64: 128, 128>}]} {
    %c0 = arith.constant 0 : index
    %c0_0 = arith.constant 0 : index
    %c0_1 = arith.constant 0 : index
    %0 = vector.load %arg1[%c0, %c0_0, %c0_1] : memref<128x8x128xbf16, #tpu.memory_space<vmem>>, vector<128x8x128xbf16>
    %c0_2 = arith.constant 0 : index
    %c0_3 = arith.constant 0 : index
    %1 = vector.load %arg2[%c0_2, %c0_3] : memref<128x128xbf16, #tpu.memory_space<vmem>>, vector<128x128xbf16>
    %cst = arith.constant dense<0.000000e+00> : vector<128x8x128xf32>
    %2 = tpu.matmul %0, %1, %cst {dimension_numbers = #tpu.dot_dimension_numbers<[2], [0], [0, 1], [1], [0, 0, 0, 1, 1, 1], [], []>} : vector<128x8x128xbf16>, vector<128x128xbf16>, vector<128x8x128xf32> -> vector<128x8x128xf32>
    %c0_4 = arith.constant 0 : index
    %c0_5 = arith.constant 0 : index
    %3 = vector.load %arg3[%c0_4, %c0_5] : memref<1x128xf32, #tpu.memory_space<vmem>>, vector<1x128xf32>
    %4 = vector.shape_cast %3 : vector<1x128xf32> to vector<128xf32>
    %5 = vector.shape_cast %4 : vector<128xf32> to vector<1x1x128xf32>
    %6 = vector.broadcast %5 : vector<1x1x128xf32> to vector<128x8x128xf32>
    %7 = arith.addf %2, %6 : vector<128x8x128xf32>
    %cst_6 = arith.constant 0.000000e+00 : f32
    %8 = vector.broadcast %cst_6 : f32 to vector<128x8x128xf32>
    %9 = arith.maximumf %7, %8 : vector<128x8x128xf32>
    %cst_7 = arith.constant dense<0xFF800000> : vector<128x128xf32>
    %10 = vector.multi_reduction <maximumf>, %9, %cst_7 [1] : vector<128x8x128xf32> to vector<128x128xf32>
    %11 = arith.truncf %10 : vector<128x128xf32> to vector<128x128xbf16>
    %c0_8 = arith.constant 0 : index
    %c0_9 = arith.constant 0 : index
    %12 = vector.load %arg4[%c0_8, %c0_9] : memref<128x128xbf16, #tpu.memory_space<vmem>>, vector<128x128xbf16>
    %cst_10 = arith.constant dense<0.000000e+00> : vector<128x128xf32>
    %13 = tpu.matmul %11, %12, %cst_10 {dimension_numbers = #tpu.dot_dimension_numbers<[1], [0], [0], [1], [0, 0, 1, 1], [], []>} : vector<128x128xbf16>, vector<128x128xbf16>, vector<128x128xf32> -> vector<128x128xf32>
    %c0_11 = arith.constant 0 : index
    %c0_12 = arith.constant 0 : index
    %14 = vector.load %arg5[%c0_11, %c0_12] : memref<1x128xf32, #tpu.memory_space<vmem>>, vector<1x128xf32>
    %15 = vector.shape_cast %14 : vector<1x128xf32> to vector<128xf32>
    %16 = vector.shape_cast %15 : vector<128xf32> to vector<1x128xf32>
    %17 = vector.broadcast %16 : vector<1x128xf32> to vector<128x128xf32>
    %18 = arith.addf %13, %17 : vector<128x128xf32>
    %c0_13 = arith.constant 0 : index
    %c0_14 = arith.constant 0 : index
    %19 = vector.load %arg6[%c0_13, %c0_14] : memref<128x128xf32, #tpu.memory_space<vmem>>, vector<128x128xf32>
    tpu.vector_store %arg6[%c0_13, %c0_14], %18 {strides = array<i32>} : memref<128x128xf32, #tpu.memory_space<vmem>>, vector<128x128xf32>,
    return
  }
  func.func @transform_0(%arg0: i32) -> (i32, i32, i32) {
    %c0_i32 = arith.constant 0 : i32
    %c0_i32_0 = arith.constant 0 : i32
    %c0_i32_1 = arith.constant 0 : i32
    return %arg0, %c0_i32, %c0_i32_0 : i32, i32, i32
  }
  func.func @transform_1(%arg0: i32) -> (i32, i32) {
    %c0_i32 = arith.constant 0 : i32
    %c0_i32_0 = arith.constant 0 : i32
    %c0_i32_1 = arith.constant 0 : i32
    return %c0_i32, %c0_i32_0 : i32, i32
  }
  func.func @transform_2(%arg0: i32) -> (i32, i32) {
    %c0_i32 = arith.constant 0 : i32
    %c0_i32_0 = arith.constant 0 : i32
    %c0_i32_1 = arith.constant 0 : i32
    return %c0_i32, %c0_i32_0 : i32, i32
  }
  func.func @transform_3(%arg0: i32) -> (i32, i32) {
    %c0_i32 = arith.constant 0 : i32
    %c0_i32_0 = arith.constant 0 : i32
    %c0_i32_1 = arith.constant 0 : i32
    return %c0_i32, %c0_i32_0 : i32, i32
  }
  func.func @transform_4(%arg0: i32) -> (i32, i32) {
    %c0_i32 = arith.constant 0 : i32
    %c0_i32_0 = arith.constant 0 : i32
    %c0_i32_1 = arith.constant 0 : i32
    return %c0_i32, %c0_i32_0 : i32, i32
  }
  func.func @transform_5(%arg0: i32) -> (i32, i32) {
    %c0_i32 = arith.constant 0 : i32
    %c0_i32_0 = arith.constant 0 : i32
    return %arg0, %c0_i32 : i32, i32
  }
}

</mosaic_0001>

<llo_original>
// kernel: tpu_custom_call.1
$region0: #{tpu_custom_call.1}
  #allocation0 [shape = 'u32[]', space=smem, size = 0x4, offset = 0x4, fixed_abs, tag = 'smem constant byte address 0x4 - core index']
  #allocation1 [shape = 'u32[144,128]{1,0:T(1,128)}', space=vmem, size = 0x12000, scoped, tag = 'internal scratch']
  %s0 = inlined_call_operand.hbm [shape: bf16[256,8,128], index: 0, kind: input, shape index: {}]
  %s1 = inlined_call_operand.hbm [shape: bf16[128,128], index: 1, kind: input, shape index: {}]
  %s2 = inlined_call_operand.vmem [shape: f32[1,128], index: 2, kind: input, shape index: {}]
  %s3 = inlined_call_operand.hbm [shape: bf16[128,128], index: 3, kind: input, shape index: {}]
  %s4 = inlined_call_operand.vmem [shape: f32[1,128], index: 4, kind: input, shape index: {}]
  %s5 = inlined_call_operand.hbm [shape: f32[256,128], index: 5, kind: output, shape index: {}]
  %s6 = sld [smem:[#allocation0]]
  $region65: #{tpu_custom_call.1} parent=0
    _
  %s8 = ssub.s32 1, %s6
  %s9 = scalar_select 0, %s8, %s6
  $region1: #{tpu_custom_call.1} parent=0
    #allocation2 [shape = 'u8[524288]{0}', space=vmem, size = 0x80000, scoped, tag = 'input window, operand 0']
    #allocation3 [shape = 's32[2]{0}', space=sflag, size = 0x8, scoped, tag = 'scoped memory for tpu_custom_call.1']
    #allocation4 [shape = 's32[2]{0}', space=sflag, size = 0x8, scoped, tag = 'scoped memory for tpu_custom_call.1']
    #allocation5 [shape = 'u8[32768]{0}', space=vmem, size = 0x8000, scoped, tag = 'input window, operand 1, single buffered']
    #allocation6 [shape = 's32[1]{0}', space=sflag, size = 0x4, scoped, tag = 'scoped memory for tpu_custom_call.1']
    #allocation7 [shape = 'u8[32768]{0}', space=vmem, size = 0x8000, scoped, tag = 'input window, operand 3, single buffered']
    #allocation8 [shape = 'u8[131072]{0}', space=vmem, size = 0x20000, scoped, tag = 'output window, operand 0']
    %10 = vsyncpa [#allocation3], 0
    %s11 = scalar_lea.sflag [#allocation3], 1
    %12 = vsyncpa %s11, 0
    %13 = vsyncpa [#allocation6], 0
    %14 = vsyncpa [#allocation4], 0
    %s15 = scalar_lea.sflag [#allocation4], 1
    %16 = vsyncpa %s15, 0
    loop: start=0, step=1, limit=4
    $region2: #{tpu_custom_call.1} parent=1 // loop_pre_header
      _
    $region3: #{tpu_custom_call.1} parent=1 // loop_header
      %s18 = sphi 0, %s22
      %p19 = scmp.ge.s32.totalorder %s18, 4
      %s28 = sphi 0, %s30
      %s31 = sphi 0, %s28
      %s32 = sphi 0, %s31
      %s48 = sphi 0, %s32
      %s52 = sphi 0, %s52
      %s54 = sphi 0, %s52
      %s55 = sphi 0, %s54
      %s69 = sphi 0, %s55
      %s73 = sphi 0, %s73
      %s75 = sphi 0, %s73
      %s76 = sphi 0, %s75
      %s90 = sphi 0, %s76
      %s94 = sphi 0, %s94
      %s96 = sphi 0, %s94
      %s97 = sphi 0, %s96
      %s111 = sphi 0, %s97
      %s115 = sphi 0, %s115
      %s117 = sphi 0, %s115
      %s118 = sphi 0, %s117
      %s132 = sphi 0, %s118
      %s138 = sphi 0, %s140
      %s141 = sphi 0, %s138
      %s142 = sphi 0, %s141
      %s158 = sphi 0, %s142
    $region4: #{tpu_custom_call.1} parent=1 // loop_header_branch
      %21 = sbr.rel (%p19) target = $region8
    $region5: #{tpu_custom_call.1} parent=1 // loop_body
      %s23 = ssub.s32 %s18, 1
      %s24 = ssub.s32 %s18, 2
      %s25 = sadd.s32 %s18, 1
      %s26 = ssub.s32 %s18, %s25
      %p27 = scmp.eq.s32.totalorder %s26, 0
      %s29 = sadd.s32 %s28, 1
      %s30 = scalar_select %p27, %s28, %s29
      %p33 = pneg %p27
      %p34 = scmp.eq.s32.totalorder %s18, 1
      %p35 = por %p33, %p34
      %p36 = scmp.ne.s32.totalorder %s28, %s31
      %p37 = scmp.eq.s32.totalorder %s18, 0
      %p38 = por %p36, %p37
      %p39 = scmp.ne.s32.totalorder %s28, %s31
      %p40 = scmp.eq.s32.totalorder %s23, 1
      %p41 = por %p39, %p40
      %p42 = scmp.ne.s32.totalorder %s31, %s32
      %p43 = scmp.eq.s32.totalorder %s23, 0
      %p44 = por %p42, %p43
      %p45 = scmp.ne.s32.totalorder %s31, %s32
      %p46 = scmp.eq.s32.totalorder %s24, 1
      %p47 = por %p45, %p46
      %p49 = scmp.ne.s32.totalorder %s32, %s48
      %p50 = scmp.eq.s32.totalorder %s24, 0
      %p51 = por %p49, %p50
      %s53 = sadd.s32 %s52, 1
      %p56 = scmp.eq.s32.totalorder %s18, 1
      %p57 = scmp.ne.s32.totalorder %s52, %s54
      %p58 = scmp.eq.s32.totalorder %s18, 0
      %p59 = por %p57, %p58
      %p60 = scmp.ne.s32.totalorder %s52, %s54
      %p61 = scmp.eq.s32.totalorder %s23, 1
      %p62 = por %p60, %p61
      %p63 = scmp.ne.s32.totalorder %s54, %s55
      %p64 = scmp.eq.s32.totalorder %s23, 0
      %p65 = por %p63, %p64
      %p66 = scmp.ne.s32.totalorder %s54, %s55
      %p67 = scmp.eq.s32.totalorder %s24, 1
      %p68 = por %p66, %p67
      %p70 = scmp.ne.s32.totalorder %s55, %s69
      %p71 = scmp.eq.s32.totalorder %s24, 0
      %p72 = por %p70, %p71
      %s74 = sadd.s32 %s73, 1
      %p77 = scmp.eq.s32.totalorder %s18, 1
      %p78 = scmp.ne.s32.totalorder %s73, %s75
      %p79 = scmp.eq.s32.totalorder %s18, 0
      %p80 = por %p78, %p79
      %p81 = scmp.ne.s32.totalorder %s73, %s75
      %p82 = scmp.eq.s32.totalorder %s23, 1
      %p83 = por %p81, %p82
      %p84 = scmp.ne.s32.totalorder %s75, %s76
      %p85 = scmp.eq.s32.totalorder %s23, 0
      %p86 = por %p84, %p85
      %p87 = scmp.ne.s32.totalorder %s75, %s76
      %p88 = scmp.eq.s32.totalorder %s24, 1
      %p89 = por %p87, %p88
      %p91 = scmp.ne.s32.totalorder %s76, %s90
      %p92 = scmp.eq.s32.totalorder %s24, 0
      %p93 = por %p91, %p92
      %s95 = sadd.s32 %s94, 1
      %p98 = scmp.eq.s32.totalorder %s18, 1
      %p99 = scmp.ne.s32.totalorder %s94, %s96
      %p100 = scmp.eq.s32.totalorder %s18, 0
      %p101 = por %p99, %p100
      %p102 = scmp.ne.s32.totalorder %s94, %s96
      %p103 = scmp.eq.s32.totalorder %s23, 1
      %p104 = por %p102, %p103
      %p105 = scmp.ne.s32.totalorder %s96, %s97
      %p106 = scmp.eq.s32.totalorder %s23, 0
      %p107 = por %p105, %p106
      %p108 = scmp.ne.s32.totalorder %s96, %s97
      %p109 = scmp.eq.s32.totalorder %s24, 1
      %p110 = por %p108, %p109
      %p112 = scmp.ne.s32.totalorder %s97, %s111
      %p113 = scmp.eq.s32.totalorder %s24, 0
      %p114 = por %p112, %p113
      %s116 = sadd.s32 %s115, 1
      %p119 = scmp.eq.s32.totalorder %s18, 1
      %p120 = scmp.ne.s32.totalorder %s115, %s117
      %p121 = scmp.eq.s32.totalorder %s18, 0
      %p122 = por %p120, %p121
      %p123 = scmp.ne.s32.totalorder %s115, %s117
      %p124 = scmp.eq.s32.totalorder %s23, 1
      %p125 = por %p123, %p124
      %p126 = scmp.ne.s32.totalorder %s117, %s118
      %p127 = scmp.eq.s32.totalorder %s23, 0
      %p128 = por %p126, %p127
      %p129 = scmp.ne.s32.totalorder %s117, %s118
      %p130 = scmp.eq.s32.totalorder %s24, 1
      %p131 = por %p129, %p130
      %p133 = scmp.ne.s32.totalorder %s118, %s132
      %p134 = scmp.eq.s32.totalorder %s24, 0
      %p135 = por %p133, %p134
      %s136 = ssub.s32 %s18, %s25
      %p137 = scmp.eq.s32.totalorder %s136, 0
      %s139 = sadd.s32 %s138, 1
      %s140 = scalar_select %p137, %s138, %s139
      %p143 = pneg %p137
      %p144 = scmp.eq.s32.totalorder %s18, 1
      %p145 = por %p143, %p144
      %p146 = scmp.ne.s32.totalorder %s138, %s141
      %p147 = scmp.eq.s32.totalorder %s18, 0
      %p148 = por %p146, %p147
      %p149 = scmp.ne.s32.totalorder %s138, %s141
      %p150 = scmp.eq.s32.totalorder %s23, 1
      %p151 = por %p149, %p150
      %p152 = scmp.ne.s32.totalorder %s141, %s142
      %p153 = scmp.eq.s32.totalorder %s23, 0
      %p154 = por %p152, %p153
      %p155 = scmp.ne.s32.totalorder %s141, %s142
      %p156 = scmp.eq.s32.totalorder %s24, 1
      %p157 = por %p155, %p156
      %p159 = scmp.ne.s32.totalorder %s142, %s158
      %p160 = scmp.eq.s32.totalorder %s24, 0
      %p161 = por %p159, %p160
      %p162 = scmp.le.s32.totalorder 1, %s18
      %p163 = scmp.lt.s32.totalorder %s18, 3
      %p164 = pnand %p162, %p163
      %p165 = pneg %p164
      // Predicated region
      $region9: #{tpu_custom_call.1} parent=5 // pred_check
        _
      $region10: #{tpu_custom_call.1} parent=5 // pred_check_branch
        %167 = sbr.rel (%p164) target = $region12
      $region11: #{tpu_custom_call.1} parent=5 // pred_region
        %s168 = ssub.s32 %s18, 1
        // Predicated region
        $region13: #{tpu_custom_call.1} parent=11 // pred_check
          %p169 = pneg %p65
        $region14: #{tpu_custom_call.1} parent=11 // pred_check_branch
          %171 = sbr.rel (%p169) target = $region16
        $region15: #{tpu_custom_call.1} parent=11 // pred_region
          %s173 = ssub.s32 1024, 1024
          %174 = vsyncadd [#allocation6], %s173
          %s175 = sshll.u32 [#allocation5], 4
          %s176 = int_to_ptr.vmem [resolvable:$true] %s175
          %181 = dma.hbm_to_vmem [thread:$0]  %s1, 1024, %s176, [#allocation6], 64, 64, 4
        $region16: #{tpu_custom_call.1} parent=11 // pred_fallthru
          _
        // Predicated region
        $region17: #{tpu_custom_call.1} parent=11 // pred_check
          %p182 = pneg %p86
        $region18: #{tpu_custom_call.1} parent=11 // pred_check_branch
          %184 = sbr.rel (%p182) target = $region20
        $region19: #{tpu_custom_call.1} parent=11 // pred_region
          _
        $region20: #{tpu_custom_call.1} parent=11 // pred_fallthru
          _
        // Predicated region
        $region21: #{tpu_custom_call.1} parent=11 // pred_check
          %p185 = pneg %p107
        $region22: #{tpu_custom_call.1} parent=11 // pred_check_branch
          %187 = sbr.rel (%p185) target = $region24
        $region23: #{tpu_custom_call.1} parent=11 // pred_region
          %s189 = ssub.s32 1024, 1024
          %190 = vsyncadd [#allocation6], %s189
          %s191 = sshll.u32 [#allocation7], 4
          %s192 = int_to_ptr.vmem [resolvable:$true] %s191
          %197 = dma.hbm_to_vmem [thread:$0]  %s3, 1024, %s192, [#allocation6], 64, 64, 4
        $region24: #{tpu_custom_call.1} parent=11 // pred_fallthru
          _
        // Predicated region
        $region25: #{tpu_custom_call.1} parent=11 // pred_check
          %p198 = pneg %p128
        $region26: #{tpu_custom_call.1} parent=11 // pred_check_branch
          %200 = sbr.rel (%p198) target = $region28
        $region27: #{tpu_custom_call.1} parent=11 // pred_region
          _
        $region28: #{tpu_custom_call.1} parent=11 // pred_fallthru
          _
      $region12: #{tpu_custom_call.1} parent=5 // pred_fallthru
        _
      %p201 = scmp.lt.s32.totalorder %s18, 2
      // Predicated region
      $region29: #{tpu_custom_call.1} parent=5 // pred_check
        %p202 = pneg %p201
      $region30: #{tpu_custom_call.1} parent=5 // pred_check_branch
        %204 = sbr.rel (%p202) target = $region32
      $region31: #{tpu_custom_call.1} parent=5 // pred_region
        // Predicated region
        $region33: #{tpu_custom_call.1} parent=31 // pred_check
          %p205 = pneg %p38
        $region34: #{tpu_custom_call.1} parent=31 // pred_check_branch
          %207 = sbr.rel (%p205) target = $region36
        $region35: #{tpu_custom_call.1} parent=31 // pred_region
          %s208 = sand.u32 %s28, 1
          %s209 = scalar_lea.sflag [#allocation3], %s208
          %s210 = sand.u32 %s28, 1
          %s211 = smul.addr %s210, 512
          %s212 = scalar_lea.vmem [#allocation2], %s211
          %s213 = smul.u32 128, %s18
          %s215 = ssub.s32 8192, 8192
          %216 = vsyncadd %s209, %s215
          %s217 = smul.addr %s213, 64
          %s218 = scalar_lea.hbm %s0, %s217
          %s219 = sshll.u32 %s212, 4
          %s220 = int_to_ptr.vmem [resolvable:$true] %s219
          %225 = dma.hbm_to_vmem [thread:$0]  %s218, 8192, %s220, %s209, 64, 64, 4
        $region36: #{tpu_custom_call.1} parent=31 // pred_fallthru
          _
      $region32: #{tpu_custom_call.1} parent=5 // pred_fallthru
        _
      %p226 = scmp.le.s32.totalorder 1, %s18
      %p227 = scmp.lt.s32.totalorder %s18, 3
      %p228 = pnand %p226, %p227
      %p229 = pneg %p228
      // Predicated region
      $region37: #{tpu_custom_call.1} parent=5 // pred_check
        _
      $region38: #{tpu_custom_call.1} parent=5 // pred_check_branch
        %231 = sbr.rel (%p228) target = $region40
      $region39: #{tpu_custom_call.1} parent=5 // pred_region
        %s232 = ssub.s32 %s18, 1
        %s233 = sand.u32 %s31, 1
        %s234 = scalar_lea.sflag [#allocation3], %s233
        %s235 = sand.u32 %s31, 1
        %s236 = smul.addr %s235, 512
        %s237 = scalar_lea.vmem [#allocation2], %s236
        // Predicated region
        $region41: #{tpu_custom_call.1} parent=39 // pred_check
          %p238 = pneg %p44
        $region42: #{tpu_custom_call.1} parent=39 // pred_check_branch
          %240 = sbr.rel (%p238) target = $region44
        $region43: #{tpu_custom_call.1} parent=39 // pred_region
          %241 = dma.done %s234, 8192
        $region44: #{tpu_custom_call.1} parent=39 // pred_fallthru
          _
        // Predicated region
        $region45: #{tpu_custom_call.1} parent=39 // pred_check
          %p242 = pneg %p65
        $region46: #{tpu_custom_call.1} parent=39 // pred_check_branch
          %244 = sbr.rel (%p242) target = $region48
        $region47: #{tpu_custom_call.1} parent=39 // pred_region
          %245 = dma.done [#allocation6], 1024
        $region48: #{tpu_custom_call.1} parent=39 // pred_fallthru
          _
        // Predicated region
        $region49: #{tpu_custom_call.1} parent=39 // pred_check
          %p246 = pneg %p107
        $region50: #{tpu_custom_call.1} parent=39 // pred_check_branch
          %248 = sbr.rel (%p246) target = $region52
        $region51: #{tpu_custom_call.1} parent=39 // pred_region
          %249 = dma.done [#allocation6], 1024
        $region52: #{tpu_custom_call.1} parent=39 // pred_fallthru
          _
        %s250 = sand.u32 %s31, 1
        %s251 = scalar_lea.sflag [#allocation3], %s250
        %s252 = sand.u32 %s31, 1
        %s253 = smul.addr %s252, 512
        %s254 = scalar_lea.vmem [#allocation2], %s253
        %p255 = pneg %p44
        %p256 = pneg %p41
        %p257 = pneg %p65
        %p258 = pneg %p62
        %p259 = pneg %p86
        %p260 = pneg %p83
        %p261 = pneg %p107
        %p262 = pneg %p104
        %p263 = pneg %p128
        %p264 = pneg %p125
        %p265 = pneg %p154
        %p266 = pneg %p151
        %s267 = sand.u32 %s141, 1
        %s268 = scalar_lea.sflag [#allocation4], %s267
        %s269 = sand.u32 %s141, 1
        %s270 = smul.addr %s269, 128
        %s271 = scalar_lea.vmem [#allocation8], %s270
        %s272 = smul.u32 128, %s23
        %s273 = smul.u32 16, %s23
        %v275 = vld [vmem:[%s237] sm:$0xf]
        %v276 = vld [vmem:[%s237 + $0x4] sm:$0xf]
        %v277 = vld [vmem:[%s237 + $0x8] sm:$0xf]
        %v278 = vld [vmem:[%s237 + $0xc] sm:$0xf]
        %v279 = vld [vmem:[%s237 + $0x10] sm:$0xf]
        %v280 = vld [vmem:[%s237 + $0x14] sm:$0xf]
        %v281 = vld [vmem:[%s237 + $0x18] sm:$0xf]
        %v282 = vld [vmem:[%s237 + $0x1c] sm:$0xf]
        %v283 = vld [vmem:[%s237 + $0x20] sm:$0xf]
        %v284 = vld [vmem:[%s237 + $0x24] sm:$0xf]
        %v285 = vld [vmem:[%s237 + $0x28] sm:$0xf]
        %v286 = vld [vmem:[%s237 + $0x2c] sm:$0xf]
        %v287 = vld [vmem:[%s237 + $0x30] sm:$0xf]
        %v288 = vld [vmem:[%s237 + $0x34] sm:$0xf]
        %v289 = vld [vmem:[%s237 + $0x38] sm:$0xf]
        %v290 = vld [vmem:[%s237 + $0x3c] sm:$0xf]
        %v291 = vld [vmem:[%s237 + $0x40] sm:$0xf]
        %v292 = vld [vmem:[%s237 + $0x44] sm:$0xf]
        %v293 = vld [vmem:[%s237 + $0x48] sm:$0xf]
        %v294 = vld [vmem:[%s237 + $0x4c] sm:$0xf]
        %v295 = vld [vmem:[%s237 + $0x50] sm:$0xf]
        %v296 = vld [vmem:[%s237 + $0x54] sm:$0xf]
        %v297 = vld [vmem:[%s237 + $0x58] sm:$0xf]
        %v298 = vld [vmem:[%s237 + $0x5c] sm:$0xf]
        %v299 = vld [vmem:[%s237 + $0x60] sm:$0xf]
        %v300 = vld [vmem:[%s237 + $0x64] sm:$0xf]
        %v301 = vld [vmem:[%s237 + $0x68] sm:$0xf]
        %v302 = vld [vmem:[%s237 + $0x6c] sm:$0xf]
        %v303 = vld [vmem:[%s237 + $0x70] sm:$0xf]
        %v304 = vld [vmem:[%s237 + $0x74] sm:$0xf]
        %v305 = vld [vmem:[%s237 + $0x78] sm:$0xf]
        %v306 = vld [vmem:[%s237 + $0x7c] sm:$0xf]
        %v307 = vld [vmem:[%s237 + $0x80] sm:$0xf]
        %v308 = vld [vmem:[%s237 + $0x84] sm:$0xf]
        %v309 = vld [vmem:[%s237 + $0x88] sm:$0xf]
        %v310 = vld [vmem:[%s237 + $0x8c] sm:$0xf]
        %v311 = vld [vmem:[%s237 + $0x90] sm:$0xf]
        %v312 = vld [vmem:[%s237 + $0x94] sm:$0xf]
        %v313 = vld [vmem:[%s237 + $0x98] sm:$0xf]
        %v314 = vld [vmem:[%s237 + $0x9c] sm:$0xf]
        %v315 = vld [vmem:[%s237 + $0xa0] sm:$0xf]
        %v316 = vld [vmem:[%s237 + $0xa4] sm:$0xf]
        %v317 = vld [vmem:[%s237 + $0xa8] sm:$0xf]
        %v318 = vld [vmem:[%s237 + $0xac] sm:$0xf]
        %v319 = vld [vmem:[%s237 + $0xb0] sm:$0xf]
        %v320 = vld [vmem:[%s237 + $0xb4] sm:$0xf]
        %v321 = vld [vmem:[%s237 + $0xb8] sm:$0xf]
        %v322 = vld [vmem:[%s237 + $0xbc] sm:$0xf]
        %v323 = vld [vmem:[%s237 + $0xc0] sm:$0xf]
        %v324 = vld [vmem:[%s237 + $0xc4] sm:$0xf]
        %v325 = vld [vmem:[%s237 + $0xc8] sm:$0xf]
        %v326 = vld [vmem:[%s237 + $0xcc] sm:$0xf]
        %v327 = vld [vmem:[%s237 + $0xd0] sm:$0xf]
        %v328 = vld [vmem:[%s237 + $0xd4] sm:$0xf]
        %v329 = vld [vmem:[%s237 + $0xd8] sm:$0xf]
        %v330 = vld [vmem:[%s237 + $0xdc] sm:$0xf]
        %v331 = vld [vmem:[%s237 + $0xe0] sm:$0xf]
        %v332 = vld [vmem:[%s237 + $0xe4] sm:$0xf]
        %v333 = vld [vmem:[%s237 + $0xe8] sm:$0xf]
        %v334 = vld [vmem:[%s237 + $0xec] sm:$0xf]
        %v335 = vld [vmem:[%s237 + $0xf0] sm:$0xf]
        %v336 = vld [vmem:[%s237 + $0xf4] sm:$0xf]
        %v337 = vld [vmem:[%s237 + $0xf8] sm:$0xf]
        %v338 = vld [vmem:[%s237 + $0xfc] sm:$0xf]
        %v339 = vld [vmem:[%s237 + $0x100] sm:$0xf]
        %v340 = vld [vmem:[%s237 + $0x104] sm:$0xf]
        %v341 = vld [vmem:[%s237 + $0x108] sm:$0xf]
        %v342 = vld [vmem:[%s237 + $0x10c] sm:$0xf]
        %v343 = vld [vmem:[%s237 + $0x110] sm:$0xf]
        %v344 = vld [vmem:[%s237 + $0x114] sm:$0xf]
        %v345 = vld [vmem:[%s237 + $0x118] sm:$0xf]
        %v346 = vld [vmem:[%s237 + $0x11c] sm:$0xf]
        %v347 = vld [vmem:[%s237 + $0x120] sm:$0xf]
        %v348 = vld [vmem:[%s237 + $0x124] sm:$0xf]
        %v349 = vld [vmem:[%s237 + $0x128] sm:$0xf]
        %v350 = vld [vmem:[%s237 + $0x12c] sm:$0xf]
        %v351 = vld [vmem:[%s237 + $0x130] sm:$0xf]
        %v352 = vld [vmem:[%s237 + $0x134] sm:$0xf]
        %v353 = vld [vmem:[%s237 + $0x138] sm:$0xf]
        %v354 = vld [vmem:[%s237 + $0x13c] sm:$0xf]
        %v355 = vld [vmem:[%s237 + $0x140] sm:$0xf]
        %v356 = vld [vmem:[%s237 + $0x144] sm:$0xf]
        %v357 = vld [vmem:[%s237 + $0x148] sm:$0xf]
        %v358 = vld [vmem:[%s237 + $0x14c] sm:$0xf]
        %v359 = vld [vmem:[%s237 + $0x150] sm:$0xf]
        %v360 = vld [vmem:[%s237 + $0x154] sm:$0xf]
        %v361 = vld [vmem:[%s237 + $0x158] sm:$0xf]
        %v362 = vld [vmem:[%s237 + $0x15c] sm:$0xf]
        %v363 = vld [vmem:[%s237 + $0x160] sm:$0xf]
        %v364 = vld [vmem:[%s237 + $0x164] sm:$0xf]
        %v365 = vld [vmem:[%s237 + $0x168] sm:$0xf]
        %v366 = vld [vmem:[%s237 + $0x16c] sm:$0xf]
        %v367 = vld [vmem:[%s237 + $0x170] sm:$0xf]
        %v368 = vld [vmem:[%s237 + $0x174] sm:$0xf]
        %v369 = vld [vmem:[%s237 + $0x178] sm:$0xf]
        %v370 = vld [vmem:[%s237 + $0x17c] sm:$0xf]
        %v371 = vld [vmem:[%s237 + $0x180] sm:$0xf]
        %v372 = vld [vmem:[%s237 + $0x184] sm:$0xf]
        %v373 = vld [vmem:[%s237 + $0x188] sm:$0xf]
        %v374 = vld [vmem:[%s237 + $0x18c] sm:$0xf]
        %v375 = vld [vmem:[%s237 + $0x190] sm:$0xf]
        %v376 = vld [vmem:[%s237 + $0x194] sm:$0xf]
        %v377 = vld [vmem:[%s237 + $0x198] sm:$0xf]
        %v378 = vld [vmem:[%s237 + $0x19c] sm:$0xf]
        %v379 = vld [vmem:[%s237 + $0x1a0] sm:$0xf]
        %v380 = vld [vmem:[%s237 + $0x1a4] sm:$0xf]
        %v381 = vld [vmem:[%s237 + $0x1a8] sm:$0xf]
        %v382 = vld [vmem:[%s237 + $0x1ac] sm:$0xf]
        %v383 = vld [vmem:[%s237 + $0x1b0] sm:$0xf]
        %v384 = vld [vmem:[%s237 + $0x1b4] sm:$0xf]
        %v385 = vld [vmem:[%s237 + $0x1b8] sm:$0xf]
        %v386 = vld [vmem:[%s237 + $0x1bc] sm:$0xf]
        %v387 = vld [vmem:[%s237 + $0x1c0] sm:$0xf]
        %v388 = vld [vmem:[%s237 + $0x1c4] sm:$0xf]
        %v389 = vld [vmem:[%s237 + $0x1c8] sm:$0xf]
        %v390 = vld [vmem:[%s237 + $0x1cc] sm:$0xf]
        %v391 = vld [vmem:[%s237 + $0x1d0] sm:$0xf]
        %v392 = vld [vmem:[%s237 + $0x1d4] sm:$0xf]
        %v393 = vld [vmem:[%s237 + $0x1d8] sm:$0xf]
        %v394 = vld [vmem:[%s237 + $0x1dc] sm:$0xf]
        %v395 = vld [vmem:[%s237 + $0x1e0] sm:$0xf]
        %v396 = vld [vmem:[%s237 + $0x1e4] sm:$0xf]
        %v397 = vld [vmem:[%s237 + $0x1e8] sm:$0xf]
        %v398 = vld [vmem:[%s237 + $0x1ec] sm:$0xf]
        %v399 = vld [vmem:[%s237 + $0x1f0] sm:$0xf]
        %v400 = vld [vmem:[%s237 + $0x1f4] sm:$0xf]
        %v401 = vld [vmem:[%s237 + $0x1f8] sm:$0xf]
        %v402 = vld [vmem:[%s237 + $0x1fc] sm:$0xf]
        %v403 = vld [vmem:[#allocation5] sm:$0xf]
        %v404 = vld [vmem:[#allocation5 + $0x4] sm:$0xf]
        %v405 = vld [vmem:[#allocation5 + $0x8] sm:$0xf]
        %v406 = vld [vmem:[#allocation5 + $0xc] sm:$0xf]
        %v407 = vld [vmem:[#allocation5 + $0x10] sm:$0xf]
        %v408 = vld [vmem:[#allocation5 + $0x14] sm:$0xf]
        %v409 = vld [vmem:[#allocation5 + $0x18] sm:$0xf]
        %v410 = vld [vmem:[#allocation5 + $0x1c] sm:$0xf]
        %v411 = vld [vmem:[#allocation5 + $0x20] sm:$0xf]
        %v412 = vld [vmem:[#allocation5 + $0x24] sm:$0xf]
        %v413 = vld [vmem:[#allocation5 + $0x28] sm:$0xf]
        %v414 = vld [vmem:[#allocation5 + $0x2c] sm:$0xf]
        %v415 = vld [vmem:[#allocation5 + $0x30] sm:$0xf]
        %v416 = vld [vmem:[#allocation5 + $0x34] sm:$0xf]
        %v417 = vld [vmem:[#allocation5 + $0x38] sm:$0xf]
        %v418 = vld [vmem:[#allocation5 + $0x3c] sm:$0xf]
        %v419 = vld [vmem:[%s2] sm:$0x1]
        %v421 = vlaneseq
        %v422 = vshrl.u32 %v421, 7
        %v423 = vsub.s32 0, %v422
        %v424 = vrot.slane %v419, %v423
        %v554 = vunpack.c.l.b16 %v275
        %v555 = vunpack.c.l.b16 %v276
        %v556 = vunpack.c.l.b16 %v277
        %v557 = vunpack.c.l.b16 %v278
        %v558 = vunpack.c.l.b16 %v279
        %v559 = vunpack.c.l.b16 %v280
        %v560 = vunpack.c.l.b16 %v281
        %v561 = vunpack.c.l.b16 %v282
        %v562 = vunpack.c.l.b16 %v283
        %v563 = vunpack.c.l.b16 %v284
        %v564 = vunpack.c.l.b16 %v285
        %v565 = vunpack.c.l.b16 %v286
        %v566 = vunpack.c.l.b16 %v287
        %v567 = vunpack.c.l.b16 %v288
        %v568 = vunpack.c.l.b16 %v289
        %v569 = vunpack.c.l.b16 %v290
        %v570 = vunpack.c.l.b16 %v291
        %v571 = vunpack.c.l.b16 %v292
        %v572 = vunpack.c.l.b16 %v293
        %v573 = vunpack.c.l.b16 %v294
        %v574 = vunpack.c.l.b16 %v295
        %v575 = vunpack.c.l.b16 %v296
        %v576 = vunpack.c.l.b16 %v297
        %v577 = vunpack.c.l.b16 %v298
        %v578 = vunpack.c.l.b16 %v299
        %v579 = vunpack.c.l.b16 %v300
        %v580 = vunpack.c.l.b16 %v301
        %v581 = vunpack.c.l.b16 %v302
        %v582 = vunpack.c.l.b16 %v303
        %v583 = vunpack.c.l.b16 %v304
        %v584 = vunpack.c.l.b16 %v305
        %v585 = vunpack.c.l.b16 %v306
        %v586 = vunpack.c.l.b16 %v307
        %v587 = vunpack.c.l.b16 %v308
        %v588 = vunpack.c.l.b16 %v309
        %v589 = vunpack.c.l.b16 %v310
        %v590 = vunpack.c.l.b16 %v311
        %v591 = vunpack.c.l.b16 %v312
        %v592 = vunpack.c.l.b16 %v313
        %v593 = vunpack.c.l.b16 %v314
        %v594 = vunpack.c.l.b16 %v315
        %v595 = vunpack.c.l.b16 %v316
        %v596 = vunpack.c.l.b16 %v317
        %v597 = vunpack.c.l.b16 %v318
        %v598 = vunpack.c.l.b16 %v319
        %v599 = vunpack.c.l.b16 %v320
        %v600 = vunpack.c.l.b16 %v321
        %v601 = vunpack.c.l.b16 %v322
        %v602 = vunpack.c.l.b16 %v323
        %v603 = vunpack.c.l.b16 %v324
        %v604 = vunpack.c.l.b16 %v325
        %v605 = vunpack.c.l.b16 %v326
        %v606 = vunpack.c.l.b16 %v327
        %v607 = vunpack.c.l.b16 %v328
        %v608 = vunpack.c.l.b16 %v329
        %v609 = vunpack.c.l.b16 %v330
        %v610 = vunpack.c.l.b16 %v331
        %v611 = vunpack.c.l.b16 %v332
        %v612 = vunpack.c.l.b16 %v333
        %v613 = vunpack.c.l.b16 %v334
        %v614 = vunpack.c.l.b16 %v335
        %v615 = vunpack.c.l.b16 %v336
        %v616 = vunpack.c.l.b16 %v337
        %v617 = vunpack.c.l.b16 %v338
        %v618 = vunpack.c.l.b16 %v339
        %v619 = vunpack.c.l.b16 %v340
        %v620 = vunpack.c.l.b16 %v341
        %v621 = vunpack.c.l.b16 %v342
        %v622 = vunpack.c.l.b16 %v343
        %v623 = vunpack.c.l.b16 %v344
        %v624 = vunpack.c.l.b16 %v345
        %v625 = vunpack.c.l.b16 %v346
        %v626 = vunpack.c.l.b16 %v347
        %v627 = vunpack.c.l.b16 %v348
        %v628 = vunpack.c.l.b16 %v349
        %v629 = vunpack.c.l.b16 %v350
        %v630 = vunpack.c.l.b16 %v351
        %v631 = vunpack.c.l.b16 %v352
        %v632 = vunpack.c.l.b16 %v353
        %v633 = vunpack.c.l.b16 %v354
        %v634 = vunpack.c.l.b16 %v355
        %v635 = vunpack.c.l.b16 %v356
        %v636 = vunpack.c.l.b16 %v357
        %v637 = vunpack.c.l.b16 %v358
        %v638 = vunpack.c.l.b16 %v359
        %v639 = vunpack.c.l.b16 %v360
        %v640 = vunpack.c.l.b16 %v361
        %v641 = vunpack.c.l.b16 %v362
        %v642 = vunpack.c.l.b16 %v363
        %v643 = vunpack.c.l.b16 %v364
        %v644 = vunpack.c.l.b16 %v365
        %v645 = vunpack.c.l.b16 %v366
        %v646 = vunpack.c.l.b16 %v367
        %v647 = vunpack.c.l.b16 %v368
        %v648 = vunpack.c.l.b16 %v369
        %v649 = vunpack.c.l.b16 %v370
        %v650 = vunpack.c.l.b16 %v371
        %v651 = vunpack.c.l.b16 %v372
        %v652 = vunpack.c.l.b16 %v373
        %v653 = vunpack.c.l.b16 %v374
        %v654 = vunpack.c.l.b16 %v375
        %v655 = vunpack.c.l.b16 %v376
        %v656 = vunpack.c.l.b16 %v377
        %v657 = vunpack.c.l.b16 %v378
        %v658 = vunpack.c.l.b16 %v379
        %v659 = vunpack.c.l.b16 %v380
        %v660 = vunpack.c.l.b16 %v381
        %v661 = vunpack.c.l.b16 %v382
        %v662 = vunpack.c.l.b16 %v383
        %v663 = vunpack.c.l.b16 %v384
        %v664 = vunpack.c.l.b16 %v385
        %v665 = vunpack.c.l.b16 %v386
        %v666 = vunpack.c.l.b16 %v387
        %v667 = vunpack.c.l.b16 %v388
        %v668 = vunpack.c.l.b16 %v389
        %v669 = vunpack.c.l.b16 %v390
        %v670 = vunpack.c.l.b16 %v391
        %v671 = vunpack.c.l.b16 %v392
        %v672 = vunpack.c.l.b16 %v393
        %v673 = vunpack.c.l.b16 %v394
        %v674 = vunpack.c.l.b16 %v395
        %v675 = vunpack.c.l.b16 %v396
        %v676 = vunpack.c.l.b16 %v397
        %v677 = vunpack.c.l.b16 %v398
        %v678 = vunpack.c.l.b16 %v399
        %v679 = vunpack.c.l.b16 %v400
        %v680 = vunpack.c.l.b16 %v401
        %v681 = vunpack.c.l.b16 %v402
        %v682 = vpack.c.b16 %v555, %v554
        %v683 = vpack.c.b16 %v557, %v556
        %v684 = vpack.c.b16 %v559, %v558
        %v685 = vpack.c.b16 %v561, %v560
        %v686 = vpack.c.b16 %v563, %v562
        %v687 = vpack.c.b16 %v565, %v564
        %v688 = vpack.c.b16 %v567, %v566
        %v689 = vpack.c.b16 %v569, %v568
        %v690 = vpack.c.b16 %v571, %v570
        %v691 = vpack.c.b16 %v573, %v572
        %v692 = vpack.c.b16 %v575, %v574
        %v693 = vpack.c.b16 %v577, %v576
        %v694 = vpack.c.b16 %v579, %v578
        %v695 = vpack.c.b16 %v581, %v580
        %v696 = vpack.c.b16 %v583, %v582
        %v697 = vpack.c.b16 %v585, %v584
        %v698 = vpack.c.b16 %v587, %v586
        %v699 = vpack.c.b16 %v589, %v588
        %v700 = vpack.c.b16 %v591, %v590
        %v701 = vpack.c.b16 %v593, %v592
        %v702 = vpack.c.b16 %v595, %v594
        %v703 = vpack.c.b16 %v597, %v596
        %v704 = vpack.c.b16 %v599, %v598
        %v705 = vpack.c.b16 %v601, %v600
        %v706 = vpack.c.b16 %v603, %v602
        %v707 = vpack.c.b16 %v605, %v604
        %v708 = vpack.c.b16 %v607, %v606
        %v709 = vpack.c.b16 %v609, %v608
        %v710 = vpack.c.b16 %v611, %v610
        %v711 = vpack.c.b16 %v613, %v612
        %v712 = vpack.c.b16 %v615, %v614
        %v713 = vpack.c.b16 %v617, %v616
        %v714 = vpack.c.b16 %v619, %v618
        %v715 = vpack.c.b16 %v621, %v620
        %v716 = vpack.c.b16 %v623, %v622
        %v717 = vpack.c.b16 %v625, %v624
        %v718 = vpack.c.b16 %v627, %v626
        %v719 = vpack.c.b16 %v629, %v628
        %v720 = vpack.c.b16 %v631, %v630
        %v721 = vpack.c.b16 %v633, %v632
        %v722 = vpack.c.b16 %v635, %v634
        %v723 = vpack.c.b16 %v637, %v636
        %v724 = vpack.c.b16 %v639, %v638
        %v725 = vpack.c.b16 %v641, %v640
        %v726 = vpack.c.b16 %v643, %v642
        %v727 = vpack.c.b16 %v645, %v644
        %v728 = vpack.c.b16 %v647, %v646
        %v729 = vpack.c.b16 %v649, %v648
        %v730 = vpack.c.b16 %v651, %v650
        %v731 = vpack.c.b16 %v653, %v652
        %v732 = vpack.c.b16 %v655, %v654
        %v733 = vpack.c.b16 %v657, %v656
        %v734 = vpack.c.b16 %v659, %v658
        %v735 = vpack.c.b16 %v661, %v660
        %v736 = vpack.c.b16 %v663, %v662
        %v737 = vpack.c.b16 %v665, %v664
        %v738 = vpack.c.b16 %v667, %v666
        %v739 = vpack.c.b16 %v669, %v668
        %v740 = vpack.c.b16 %v671, %v670
        %v741 = vpack.c.b16 %v673, %v672
        %v742 = vpack.c.b16 %v675, %v674
        %v743 = vpack.c.b16 %v677, %v676
        %v744 = vpack.c.b16 %v679, %v678
        %v745 = vpack.c.b16 %v681, %v680
        %v826 = vunpack.c.l.b16 %v403
        %v827 = vunpack.c.l.b16 %v404
        %v828 = vunpack.c.l.b16 %v405
        %v829 = vunpack.c.l.b16 %v406
        %v830 = vunpack.c.l.b16 %v407
        %v831 = vunpack.c.l.b16 %v408
        %v832 = vunpack.c.l.b16 %v409
        %v833 = vunpack.c.l.b16 %v410
        %v834 = vunpack.c.l.b16 %v411
        %v835 = vunpack.c.l.b16 %v412
        %v836 = vunpack.c.l.b16 %v413
        %v837 = vunpack.c.l.b16 %v414
        %v838 = vunpack.c.l.b16 %v415
        %v839 = vunpack.c.l.b16 %v416
        %v840 = vunpack.c.l.b16 %v417
        %v841 = vunpack.c.l.b16 %v418
        %v842 = vpack.c.b16 %v827, %v826
        %v843 = vpack.c.b16 %v829, %v828
        %v844 = vpack.c.b16 %v831, %v830
        %v845 = vpack.c.b16 %v833, %v832
        %v846 = vpack.c.b16 %v835, %v834
        %v847 = vpack.c.b16 %v837, %v836
        %v848 = vpack.c.b16 %v839, %v838
        %v849 = vpack.c.b16 %v841, %v840
        %858 = vmatprep.subr.bf16.mxu0 0
        %859 = vmatpush1.bf16.msra.mxu0 %v849
        %860 = vmatprep.subr.bf16.mxu0 0
        %861 = vmatpush1.bf16.msra.mxu0 %v848
        %862 = vmatprep.subr.bf16.mxu0 0
        %863 = vmatpush1.bf16.msra.mxu0 %v847
        %864 = vmatprep.subr.bf16.mxu0 0
        %865 = vmatpush1.bf16.msra.mxu0 %v846
        %866 = vmatprep.subr.bf16.mxu0 0
        %867 = vmatpush1.bf16.msra.mxu0 %v845
        %868 = vmatprep.subr.bf16.mxu0 0
        %869 = vmatpush1.bf16.msra.mxu0 %v844
        %870 = vmatprep.subr.bf16.mxu0 0
        %871 = vmatpush1.bf16.msra.mxu0 %v843
        %872 = vmatprep.subr.bf16.mxu0 0
        %873 = vmatpush1.bf16.msra.mxu0 %v842
        %874 = vmatprep.subr.bf16.mxu0 0
        %875 = vmatpush2.bf16.msra.mxu0 0
        %876 = vmatprep.subr.bf16.mxu0 0
        %877 = vmatpush2.bf16.msra.mxu0 0
        %878 = vmatprep.subr.bf16.mxu0 0
        %879 = vmatpush2.bf16.msra.mxu0 0
        %880 = vmatprep.subr.bf16.mxu0 0
        %881 = vmatpush2.bf16.msra.mxu0 0
        %882 = vmatprep.subr.bf16.mxu0 0
        %883 = vmatpush2.bf16.msra.mxu0 0
        %884 = vmatprep.subr.bf16.mxu0 0
        %885 = vmatpush2.bf16.msra.mxu0 0
        %886 = vmatprep.subr.bf16.mxu0 0
        %887 = vmatpush2.bf16.msra.mxu0 0
        %888 = vmatprep.subr.bf16.mxu0 0
        %889 = vmatpush2.bf16.msra.mxu0 0
        %890 = vmatprep.mubr.bf16.mxu0 0
        %891 = vmatmul.mubr.bf16.gmra.mxu0 %v682
        %v892 = vpop.f32.mrf.mxu0
        %v893 = vadd.f32 %v424, %v892
        %v894 = vpop.f32.mrf.mxu0
        %v895 = vpop.f32.mrf.mxu0
        %v896 = vadd.f32 %v424, %v895
        %v897 = vpop.f32.mrf.mxu0
        %898 = vmatprep.mubr.bf16.mxu0 0
        %899 = vmatmul.mubr.bf16.gmra.mxu0 %v683
        %v900 = vpop.f32.mrf.mxu0
        %v901 = vadd.f32 %v424, %v900
        %v902 = vpop.f32.mrf.mxu0
        %v903 = vpop.f32.mrf.mxu0
        %v904 = vadd.f32 %v424, %v903
        %v905 = vpop.f32.mrf.mxu0
        %906 = vmatprep.mubr.bf16.mxu0 0
        %907 = vmatmul.mubr.bf16.gmra.mxu0 %v684
        %v908 = vpop.f32.mrf.mxu0
        %v909 = vadd.f32 %v424, %v908
        %v910 = vpop.f32.mrf.mxu0
        %v911 = vpop.f32.mrf.mxu0
        %v912 = vadd.f32 %v424, %v911
        %v913 = vpop.f32.mrf.mxu0
        %914 = vmatprep.mubr.bf16.mxu0 0
        %915 = vmatmul.mubr.bf16.gmra.mxu0 %v685
        %v916 = vpop.f32.mrf.mxu0
        %v917 = vadd.f32 %v424, %v916
        %v918 = vpop.f32.mrf.mxu0
        %v919 = vpop.f32.mrf.mxu0
        %v920 = vadd.f32 %v424, %v919
        %v921 = vpop.f32.mrf.mxu0
        %922 = vmatprep.mubr.bf16.mxu0 0
        %923 = vmatmul.mubr.bf16.gmra.mxu0 %v686
        %v924 = vpop.f32.mrf.mxu0
        %v925 = vadd.f32 %v424, %v924
        %v926 = vpop.f32.mrf.mxu0
        %v927 = vpop.f32.mrf.mxu0
        %v928 = vadd.f32 %v424, %v927
        %v929 = vpop.f32.mrf.mxu0
        %930 = vmatprep.mubr.bf16.mxu0 0
        %931 = vmatmul.mubr.bf16.gmra.mxu0 %v687
        %v932 = vpop.f32.mrf.mxu0
        %v933 = vadd.f32 %v424, %v932
        %v934 = vpop.f32.mrf.mxu0
        %v935 = vpop.f32.mrf.mxu0
        %v936 = vadd.f32 %v424, %v935
        %v937 = vpop.f32.mrf.mxu0
        %938 = vmatprep.mubr.bf16.mxu0 0
        %939 = vmatmul.mubr.bf16.gmra.mxu0 %v688
        %v940 = vpop.f32.mrf.mxu0
        %v941 = vadd.f32 %v424, %v940
        %v942 = vpop.f32.mrf.mxu0
        %v943 = vpop.f32.mrf.mxu0
        %v944 = vadd.f32 %v424, %v943
        %v945 = vpop.f32.mrf.mxu0
        %946 = vmatprep.mubr.bf16.mxu0 0
        %947 = vmatmul.mubr.bf16.gmra.mxu0 %v689
        %v948 = vpop.f32.mrf.mxu0
        %v949 = vadd.f32 %v424, %v948
        %v950 = vpop.f32.mrf.mxu0
        %v951 = vpop.f32.mrf.mxu0
        %v952 = vadd.f32 %v424, %v951
        %v953 = vpop.f32.mrf.mxu0
        %954 = vmatprep.mubr.bf16.mxu0 0
        %955 = vmatmul.mubr.bf16.gmra.mxu0 %v690
        %v956 = vpop.f32.mrf.mxu0
        %v957 = vadd.f32 %v424, %v956
        %v958 = vpop.f32.mrf.mxu0
        %v959 = vpop.f32.mrf.mxu0
        %v960 = vadd.f32 %v424, %v959
        %v961 = vpop.f32.mrf.mxu0
        %962 = vmatprep.mubr.bf16.mxu0 0
        %963 = vmatmul.mubr.bf16.gmra.mxu0 %v691
        %v964 = vpop.f32.mrf.mxu0
        %v965 = vadd.f32 %v424, %v964
        %v966 = vpop.f32.mrf.mxu0
        %v967 = vpop.f32.mrf.mxu0
        %v968 = vadd.f32 %v424, %v967
        %v969 = vpop.f32.mrf.mxu0
        %970 = vmatprep.mubr.bf16.mxu0 0
        %971 = vmatmul.mubr.bf16.gmra.mxu0 %v692
        %v972 = vpop.f32.mrf.mxu0
        %v973 = vadd.f32 %v424, %v972
        %v974 = vpop.f32.mrf.mxu0
        %v975 = vpop.f32.mrf.mxu0
        %v976 = vadd.f32 %v424, %v975
        %v977 = vpop.f32.mrf.mxu0
        %978 = vmatprep.mubr.bf16.mxu0 0
        %979 = vmatmul.mubr.bf16.gmra.mxu0 %v693
        %v980 = vpop.f32.mrf.mxu0
        %v981 = vadd.f32 %v424, %v980
        %v982 = vpop.f32.mrf.mxu0
        %v983 = vpop.f32.mrf.mxu0
        %v984 = vadd.f32 %v424, %v983
        %v985 = vpop.f32.mrf.mxu0
        %986 = vmatprep.mubr.bf16.mxu0 0
        %987 = vmatmul.mubr.bf16.gmra.mxu0 %v694
        %v988 = vpop.f32.mrf.mxu0
        %v989 = vadd.f32 %v424, %v988
        %v990 = vpop.f32.mrf.mxu0
        %v991 = vpop.f32.mrf.mxu0
        %v992 = vadd.f32 %v424, %v991
        %v993 = vpop.f32.mrf.mxu0
        %994 = vmatprep.mubr.bf16.mxu0 0
        %995 = vmatmul.mubr.bf16.gmra.mxu0 %v695
        %v996 = vpop.f32.mrf.mxu0
        %v997 = vadd.f32 %v424, %v996
        %v998 = vpop.f32.mrf.mxu0
        %v999 = vpop.f32.mrf.mxu0
        %v1000 = vadd.f32 %v424, %v999
        %v1001 = vpop.f32.mrf.mxu0
        %1002 = vmatprep.mubr.bf16.mxu0 0
        %1003 = vmatmul.mubr.bf16.gmra.mxu0 %v696
        %v1004 = vpop.f32.mrf.mxu0
        %v1005 = vadd.f32 %v424, %v1004
        %v1006 = vpop.f32.mrf.mxu0
        %v1007 = vpop.f32.mrf.mxu0
        %v1008 = vadd.f32 %v424, %v1007
        %v1009 = vpop.f32.mrf.mxu0
        %1010 = vmatprep.mubr.bf16.mxu0 0
        %1011 = vmatmul.mubr.bf16.gmra.mxu0 %v697
        %v1012 = vpop.f32.mrf.mxu0
        %v1013 = vadd.f32 %v424, %v1012
        %v1014 = vpop.f32.mrf.mxu0
        %v1015 = vpop.f32.mrf.mxu0
        %v1016 = vadd.f32 %v424, %v1015
        %v1017 = vpop.f32.mrf.mxu0
        %1018 = vmatprep.mubr.bf16.mxu0 0
        %1019 = vmatmul.mubr.bf16.gmra.mxu0 %v698
        %v1020 = vpop.f32.mrf.mxu0
        %v1021 = vadd.f32 %v424, %v1020
        %v1022 = vpop.f32.mrf.mxu0
        %v1023 = vpop.f32.mrf.mxu0
        %v1024 = vadd.f32 %v424, %v1023
        %v1025 = vpop.f32.mrf.mxu0
        %1026 = vmatprep.mubr.bf16.mxu0 0
        %1027 = vmatmul.mubr.bf16.gmra.mxu0 %v699
        %v1028 = vpop.f32.mrf.mxu0
        %v1029 = vadd.f32 %v424, %v1028
        %v1030 = vpop.f32.mrf.mxu0
        %v1031 = vpop.f32.mrf.mxu0
        %v1032 = vadd.f32 %v424, %v1031
        %v1033 = vpop.f32.mrf.mxu0
        %1034 = vmatprep.mubr.bf16.mxu0 0
        %1035 = vmatmul.mubr.bf16.gmra.mxu0 %v700
        %v1036 = vpop.f32.mrf.mxu0
        %v1037 = vadd.f32 %v424, %v1036
        %v1038 = vpop.f32.mrf.mxu0
        %v1039 = vpop.f32.mrf.mxu0
        %v1040 = vadd.f32 %v424, %v1039
        %v1041 = vpop.f32.mrf.mxu0
        %1042 = vmatprep.mubr.bf16.mxu0 0
        %1043 = vmatmul.mubr.bf16.gmra.mxu0 %v701
        %v1044 = vpop.f32.mrf.mxu0
        %v1045 = vadd.f32 %v424, %v1044
        %v1046 = vpop.f32.mrf.mxu0
        %v1047 = vpop.f32.mrf.mxu0
        %v1048 = vadd.f32 %v424, %v1047
        %v1049 = vpop.f32.mrf.mxu0
        %1050 = vmatprep.mubr.bf16.mxu0 0
        %1051 = vmatmul.mubr.bf16.gmra.mxu0 %v702
        %v1052 = vpop.f32.mrf.mxu0
        %v1053 = vadd.f32 %v424, %v1052
        %v1054 = vpop.f32.mrf.mxu0
        %v1055 = vpop.f32.mrf.mxu0
        %v1056 = vadd.f32 %v424, %v1055
        %v1057 = vpop.f32.mrf.mxu0
        %1058 = vmatprep.mubr.bf16.mxu0 0
        %1059 = vmatmul.mubr.bf16.gmra.mxu0 %v703
        %v1060 = vpop.f32.mrf.mxu0
        %v1061 = vadd.f32 %v424, %v1060
        %v1062 = vpop.f32.mrf.mxu0
        %v1063 = vpop.f32.mrf.mxu0
        %v1064 = vadd.f32 %v424, %v1063
        %v1065 = vpop.f32.mrf.mxu0
        %1066 = vmatprep.mubr.bf16.mxu0 0
        %1067 = vmatmul.mubr.bf16.gmra.mxu0 %v704
        %v1068 = vpop.f32.mrf.mxu0
        %v1069 = vadd.f32 %v424, %v1068
        %v1070 = vpop.f32.mrf.mxu0
        %v1071 = vpop.f32.mrf.mxu0
        %v1072 = vadd.f32 %v424, %v1071
        %v1073 = vpop.f32.mrf.mxu0
        %1074 = vmatprep.mubr.bf16.mxu0 0
        %1075 = vmatmul.mubr.bf16.gmra.mxu0 %v705
        %v1076 = vpop.f32.mrf.mxu0
        %v1077 = vadd.f32 %v424, %v1076
        %v1078 = vpop.f32.mrf.mxu0
        %v1079 = vpop.f32.mrf.mxu0
        %v1080 = vadd.f32 %v424, %v1079
        %v1081 = vpop.f32.mrf.mxu0
        %1082 = vmatprep.mubr.bf16.mxu0 0
        %1083 = vmatmul.mubr.bf16.gmra.mxu0 %v706
        %v1084 = vpop.f32.mrf.mxu0
        %v1085 = vadd.f32 %v424, %v1084
        %v1086 = vpop.f32.mrf.mxu0
        %v1087 = vpop.f32.mrf.mxu0
        %v1088 = vadd.f32 %v424, %v1087
        %v1089 = vpop.f32.mrf.mxu0
        %1090 = vmatprep.mubr.bf16.mxu0 0
        %1091 = vmatmul.mubr.bf16.gmra.mxu0 %v707
        %v1092 = vpop.f32.mrf.mxu0
        %v1093 = vadd.f32 %v424, %v1092
        %v1094 = vpop.f32.mrf.mxu0
        %v1095 = vpop.f32.mrf.mxu0
        %v1096 = vadd.f32 %v424, %v1095
        %v1097 = vpop.f32.mrf.mxu0
        %1098 = vmatprep.mubr.bf16.mxu0 0
        %1099 = vmatmul.mubr.bf16.gmra.mxu0 %v708
        %v1100 = vpop.f32.mrf.mxu0
        %v1101 = vadd.f32 %v424, %v1100
        %v1102 = vpop.f32.mrf.mxu0
        %v1103 = vpop.f32.mrf.mxu0
        %v1104 = vadd.f32 %v424, %v1103
        %v1105 = vpop.f32.mrf.mxu0
        %1106 = vmatprep.mubr.bf16.mxu0 0
        %1107 = vmatmul.mubr.bf16.gmra.mxu0 %v709
        %v1108 = vpop.f32.mrf.mxu0
        %v1109 = vadd.f32 %v424, %v1108
        %v1110 = vpop.f32.mrf.mxu0
        %v1111 = vpop.f32.mrf.mxu0
        %v1112 = vadd.f32 %v424, %v1111
        %v1113 = vpop.f32.mrf.mxu0
        %1114 = vmatprep.mubr.bf16.mxu0 0
        %1115 = vmatmul.mubr.bf16.gmra.mxu0 %v710
        %v1116 = vpop.f32.mrf.mxu0
        %v1117 = vadd.f32 %v424, %v1116
        %v1118 = vpop.f32.mrf.mxu0
        %v1119 = vpop.f32.mrf.mxu0
        %v1120 = vadd.f32 %v424, %v1119
        %v1121 = vpop.f32.mrf.mxu0
        %1122 = vmatprep.mubr.bf16.mxu0 0
        %1123 = vmatmul.mubr.bf16.gmra.mxu0 %v711
        %v1124 = vpop.f32.mrf.mxu0
        %v1125 = vadd.f32 %v424, %v1124
        %v1126 = vpop.f32.mrf.mxu0
        %v1127 = vpop.f32.mrf.mxu0
        %v1128 = vadd.f32 %v424, %v1127
        %v1129 = vpop.f32.mrf.mxu0
        %1130 = vmatprep.mubr.bf16.mxu0 0
        %1131 = vmatmul.mubr.bf16.gmra.mxu0 %v712
        %v1132 = vpop.f32.mrf.mxu0
        %v1133 = vadd.f32 %v424, %v1132
        %v1134 = vpop.f32.mrf.mxu0
        %v1135 = vpop.f32.mrf.mxu0
        %v1136 = vadd.f32 %v424, %v1135
        %v1137 = vpop.f32.mrf.mxu0
        %1138 = vmatprep.mubr.bf16.mxu0 0
        %1139 = vmatmul.mubr.bf16.gmra.mxu0 %v713
        %v1140 = vpop.f32.mrf.mxu0
        %v1141 = vadd.f32 %v424, %v1140
        %v1142 = vpop.f32.mrf.mxu0
        %v1143 = vpop.f32.mrf.mxu0
        %v1144 = vadd.f32 %v424, %v1143
        %v1145 = vpop.f32.mrf.mxu0
        %1146 = vmatprep.mubr.bf16.mxu0 0
        %1147 = vmatmul.mubr.bf16.gmra.mxu0 %v714
        %v1148 = vpop.f32.mrf.mxu0
        %v1149 = vadd.f32 %v424, %v1148
        %v1150 = vpop.f32.mrf.mxu0
        %v1151 = vpop.f32.mrf.mxu0
        %v1152 = vadd.f32 %v424, %v1151
        %v1153 = vpop.f32.mrf.mxu0
        %1154 = vmatprep.mubr.bf16.mxu0 0
        %1155 = vmatmul.mubr.bf16.gmra.mxu0 %v715
        %v1156 = vpop.f32.mrf.mxu0
        %v1157 = vadd.f32 %v424, %v1156
        %v1158 = vpop.f32.mrf.mxu0
        %v1159 = vpop.f32.mrf.mxu0
        %v1160 = vadd.f32 %v424, %v1159
        %v1161 = vpop.f32.mrf.mxu0
        %1162 = vmatprep.mubr.bf16.mxu0 0
        %1163 = vmatmul.mubr.bf16.gmra.mxu0 %v716
        %v1164 = vpop.f32.mrf.mxu0
        %v1165 = vadd.f32 %v424, %v1164
        %v1166 = vpop.f32.mrf.mxu0
        %v1167 = vpop.f32.mrf.mxu0
        %v1168 = vadd.f32 %v424, %v1167
        %v1169 = vpop.f32.mrf.mxu0
        %1170 = vmatprep.mubr.bf16.mxu0 0
        %1171 = vmatmul.mubr.bf16.gmra.mxu0 %v717
        %v1172 = vpop.f32.mrf.mxu0
        %v1173 = vadd.f32 %v424, %v1172
        %v1174 = vpop.f32.mrf.mxu0
        %v1175 = vpop.f32.mrf.mxu0
        %v1176 = vadd.f32 %v424, %v1175
        %v1177 = vpop.f32.mrf.mxu0
        %1178 = vmatprep.mubr.bf16.mxu0 0
        %1179 = vmatmul.mubr.bf16.gmra.mxu0 %v718
        %v1180 = vpop.f32.mrf.mxu0
        %v1181 = vadd.f32 %v424, %v1180
        %v1182 = vpop.f32.mrf.mxu0
        %v1183 = vpop.f32.mrf.mxu0
        %v1184 = vadd.f32 %v424, %v1183
        %v1185 = vpop.f32.mrf.mxu0
        %1186 = vmatprep.mubr.bf16.mxu0 0
        %1187 = vmatmul.mubr.bf16.gmra.mxu0 %v719
        %v1188 = vpop.f32.mrf.mxu0
        %v1189 = vadd.f32 %v424, %v1188
        %v1190 = vpop.f32.mrf.mxu0
        %v1191 = vpop.f32.mrf.mxu0
        %v1192 = vadd.f32 %v424, %v1191
        %v1193 = vpop.f32.mrf.mxu0
        %1194 = vmatprep.mubr.bf16.mxu0 0
        %1195 = vmatmul.mubr.bf16.gmra.mxu0 %v720
        %v1196 = vpop.f32.mrf.mxu0
        %v1197 = vadd.f32 %v424, %v1196
        %v1198 = vpop.f32.mrf.mxu0
        %v1199 = vpop.f32.mrf.mxu0
        %v1200 = vadd.f32 %v424, %v1199
        %v1201 = vpop.f32.mrf.mxu0
        %1202 = vmatprep.mubr.bf16.mxu0 0
        %1203 = vmatmul.mubr.bf16.gmra.mxu0 %v721
        %v1204 = vpop.f32.mrf.mxu0
        %v1205 = vadd.f32 %v424, %v1204
        %v1206 = vpop.f32.mrf.mxu0
        %v1207 = vpop.f32.mrf.mxu0
        %v1208 = vadd.f32 %v424, %v1207
        %v1209 = vpop.f32.mrf.mxu0
        %1210 = vmatprep.mubr.bf16.mxu0 0
        %1211 = vmatmul.mubr.bf16.gmra.mxu0 %v722
        %v1212 = vpop.f32.mrf.mxu0
        %v1213 = vadd.f32 %v424, %v1212
        %v1214 = vpop.f32.mrf.mxu0
        %v1215 = vpop.f32.mrf.mxu0
        %v1216 = vadd.f32 %v424, %v1215
        %v1217 = vpop.f32.mrf.mxu0
        %1218 = vmatprep.mubr.bf16.mxu0 0
        %1219 = vmatmul.mubr.bf16.gmra.mxu0 %v723
        %v1220 = vpop.f32.mrf.mxu0
        %v1221 = vadd.f32 %v424, %v1220
        %v1222 = vpop.f32.mrf.mxu0
        %v1223 = vpop.f32.mrf.mxu0
        %v1224 = vadd.f32 %v424, %v1223
        %v1225 = vpop.f32.mrf.mxu0
        %1226 = vmatprep.mubr.bf16.mxu0 0
        %1227 = vmatmul.mubr.bf16.gmra.mxu0 %v724
        %v1228 = vpop.f32.mrf.mxu0
        %v1229 = vadd.f32 %v424, %v1228
        %v1230 = vpop.f32.mrf.mxu0
        %v1231 = vpop.f32.mrf.mxu0
        %v1232 = vadd.f32 %v424, %v1231
        %v1233 = vpop.f32.mrf.mxu0
        %1234 = vmatprep.mubr.bf16.mxu0 0
        %1235 = vmatmul.mubr.bf16.gmra.mxu0 %v725
        %v1236 = vpop.f32.mrf.mxu0
        %v1237 = vadd.f32 %v424, %v1236
        %v1238 = vpop.f32.mrf.mxu0
        %v1239 = vpop.f32.mrf.mxu0
        %v1240 = vadd.f32 %v424, %v1239
        %v1241 = vpop.f32.mrf.mxu0
        %1242 = vmatprep.mubr.bf16.mxu0 0
        %1243 = vmatmul.mubr.bf16.gmra.mxu0 %v726
        %v1244 = vpop.f32.mrf.mxu0
        %v1245 = vadd.f32 %v424, %v1244
        %v1246 = vpop.f32.mrf.mxu0
        %v1247 = vpop.f32.mrf.mxu0
        %v1248 = vadd.f32 %v424, %v1247
        %v1249 = vpop.f32.mrf.mxu0
        %1250 = vmatprep.mubr.bf16.mxu0 0
        %1251 = vmatmul.mubr.bf16.gmra.mxu0 %v727
        %v1252 = vpop.f32.mrf.mxu0
        %v1253 = vadd.f32 %v424, %v1252
        %v1254 = vpop.f32.mrf.mxu0
        %v1255 = vpop.f32.mrf.mxu0
        %v1256 = vadd.f32 %v424, %v1255
        %v1257 = vpop.f32.mrf.mxu0
        %1258 = vmatprep.mubr.bf16.mxu0 0
        %1259 = vmatmul.mubr.bf16.gmra.mxu0 %v728
        %v1260 = vpop.f32.mrf.mxu0
        %v1261 = vadd.f32 %v424, %v1260
        %v1262 = vpop.f32.mrf.mxu0
        %v1263 = vpop.f32.mrf.mxu0
        %v1264 = vadd.f32 %v424, %v1263
        %v1265 = vpop.f32.mrf.mxu0
        %1266 = vmatprep.mubr.bf16.mxu0 0
        %1267 = vmatmul.mubr.bf16.gmra.mxu0 %v729
        %v1268 = vpop.f32.mrf.mxu0
        %v1269 = vadd.f32 %v424, %v1268
        %v1270 = vpop.f32.mrf.mxu0
        %v1271 = vpop.f32.mrf.mxu0
        %v1272 = vadd.f32 %v424, %v1271
        %v1273 = vpop.f32.mrf.mxu0
        %1274 = vmatprep.mubr.bf16.mxu0 0
        %1275 = vmatmul.mubr.bf16.gmra.mxu0 %v730
        %v1276 = vpop.f32.mrf.mxu0
        %v1277 = vadd.f32 %v424, %v1276
        %v1278 = vpop.f32.mrf.mxu0
        %v1279 = vpop.f32.mrf.mxu0
        %v1280 = vadd.f32 %v424, %v1279
        %v1281 = vpop.f32.mrf.mxu0
        %1282 = vmatprep.mubr.bf16.mxu0 0
        %1283 = vmatmul.mubr.bf16.gmra.mxu0 %v731
        %v1284 = vpop.f32.mrf.mxu0
        %v1285 = vadd.f32 %v424, %v1284
        %v1286 = vpop.f32.mrf.mxu0
        %v1287 = vpop.f32.mrf.mxu0
        %v1288 = vadd.f32 %v424, %v1287
        %v1289 = vpop.f32.mrf.mxu0
        %1290 = vmatprep.mubr.bf16.mxu0 0
        %1291 = vmatmul.mubr.bf16.gmra.mxu0 %v732
        %v1292 = vpop.f32.mrf.mxu0
        %v1293 = vadd.f32 %v424, %v1292
        %v1294 = vpop.f32.mrf.mxu0
        %v1295 = vpop.f32.mrf.mxu0
        %v1296 = vadd.f32 %v424, %v1295
        %v1297 = vpop.f32.mrf.mxu0
        %1298 = vmatprep.mubr.bf16.mxu0 0
        %1299 = vmatmul.mubr.bf16.gmra.mxu0 %v733
        %v1300 = vpop.f32.mrf.mxu0
        %v1301 = vadd.f32 %v424, %v1300
        %v1302 = vpop.f32.mrf.mxu0
        %v1303 = vpop.f32.mrf.mxu0
        %v1304 = vadd.f32 %v424, %v1303
        %v1305 = vpop.f32.mrf.mxu0
        %1306 = vmatprep.mubr.bf16.mxu0 0
        %1307 = vmatmul.mubr.bf16.gmra.mxu0 %v734
        %v1308 = vpop.f32.mrf.mxu0
        %v1309 = vadd.f32 %v424, %v1308
        %v1310 = vpop.f32.mrf.mxu0
        %v1311 = vpop.f32.mrf.mxu0
        %v1312 = vadd.f32 %v424, %v1311
        %v1313 = vpop.f32.mrf.mxu0
        %1314 = vmatprep.mubr.bf16.mxu0 0
        %1315 = vmatmul.mubr.bf16.gmra.mxu0 %v735
        %v1316 = vpop.f32.mrf.mxu0
        %v1317 = vadd.f32 %v424, %v1316
        %v1318 = vpop.f32.mrf.mxu0
        %v1319 = vpop.f32.mrf.mxu0
        %v1320 = vadd.f32 %v424, %v1319
        %v1321 = vpop.f32.mrf.mxu0
        %1322 = vmatprep.mubr.bf16.mxu0 0
        %1323 = vmatmul.mubr.bf16.gmra.mxu0 %v736
        %v1324 = vpop.f32.mrf.mxu0
        %v1325 = vadd.f32 %v424, %v1324
        %v1326 = vpop.f32.mrf.mxu0
        %v1327 = vpop.f32.mrf.mxu0
        %v1328 = vadd.f32 %v424, %v1327
        %v1329 = vpop.f32.mrf.mxu0
        %1330 = vmatprep.mubr.bf16.mxu0 0
        %1331 = vmatmul.mubr.bf16.gmra.mxu0 %v737
        %v1332 = vpop.f32.mrf.mxu0
        %v1333 = vadd.f32 %v424, %v1332
        %v1334 = vpop.f32.mrf.mxu0
        %v1335 = vpop.f32.mrf.mxu0
        %v1336 = vadd.f32 %v424, %v1335
        %v1337 = vpop.f32.mrf.mxu0
        %1338 = vmatprep.mubr.bf16.mxu0 0
        %1339 = vmatmul.mubr.bf16.gmra.mxu0 %v738
        %v1340 = vpop.f32.mrf.mxu0
        %v1341 = vadd.f32 %v424, %v1340
        %v1342 = vpop.f32.mrf.mxu0
        %v1343 = vpop.f32.mrf.mxu0
        %v1344 = vadd.f32 %v424, %v1343
        %v1345 = vpop.f32.mrf.mxu0
        %1346 = vmatprep.mubr.bf16.mxu0 0
        %1347 = vmatmul.mubr.bf16.gmra.mxu0 %v739
        %v1348 = vpop.f32.mrf.mxu0
        %v1349 = vadd.f32 %v424, %v1348
        %v1350 = vpop.f32.mrf.mxu0
        %v1351 = vpop.f32.mrf.mxu0
        %v1352 = vadd.f32 %v424, %v1351
        %v1353 = vpop.f32.mrf.mxu0
        %1354 = vmatprep.mubr.bf16.mxu0 0
        %1355 = vmatmul.mubr.bf16.gmra.mxu0 %v740
        %v1356 = vpop.f32.mrf.mxu0
        %v1357 = vadd.f32 %v424, %v1356
        %v1358 = vpop.f32.mrf.mxu0
        %v1359 = vpop.f32.mrf.mxu0
        %v1360 = vadd.f32 %v424, %v1359
        %v1361 = vpop.f32.mrf.mxu0
        %1362 = vmatprep.mubr.bf16.mxu0 0
        %1363 = vmatmul.mubr.bf16.gmra.mxu0 %v741
        %v1364 = vpop.f32.mrf.mxu0
        %v1365 = vadd.f32 %v424, %v1364
        %v1366 = vpop.f32.mrf.mxu0
        %v1367 = vpop.f32.mrf.mxu0
        %v1368 = vadd.f32 %v424, %v1367
        %v1369 = vpop.f32.mrf.mxu0
        %1370 = vmatprep.mubr.bf16.mxu0 0
        %1371 = vmatmul.mubr.bf16.gmra.mxu0 %v742
        %v1372 = vpop.f32.mrf.mxu0
        %v1373 = vadd.f32 %v424, %v1372
        %v1374 = vpop.f32.mrf.mxu0
        %v1375 = vpop.f32.mrf.mxu0
        %v1376 = vadd.f32 %v424, %v1375
        %v1377 = vpop.f32.mrf.mxu0
        %1378 = vmatprep.mubr.bf16.mxu0 0
        %1379 = vmatmul.mubr.bf16.gmra.mxu0 %v743
        %v1380 = vpop.f32.mrf.mxu0
        %v1381 = vadd.f32 %v424, %v1380
        %v1382 = vpop.f32.mrf.mxu0
        %v1383 = vpop.f32.mrf.mxu0
        %v1384 = vadd.f32 %v424, %v1383
        %v1385 = vpop.f32.mrf.mxu0
        %1386 = vmatprep.mubr.bf16.mxu0 0
        %1387 = vmatmul.mubr.bf16.gmra.mxu0 %v744
        %v1388 = vpop.f32.mrf.mxu0
        %v1389 = vadd.f32 %v424, %v1388
        %v1390 = vpop.f32.mrf.mxu0
        %v1391 = vpop.f32.mrf.mxu0
        %v1392 = vadd.f32 %v424, %v1391
        %v1393 = vpop.f32.mrf.mxu0
        %1394 = vmatprep.mubr.bf16.mxu0 0
        %1395 = vmatmul.mubr.bf16.gmra.mxu0 %v745
        %v1396 = vpop.f32.mrf.mxu0
        %v1397 = vadd.f32 %v424, %v1396
        %v1398 = vpop.f32.mrf.mxu0
        %v1399 = vpop.f32.mrf.mxu0
        %v1400 = vadd.f32 %v424, %v1399
        %v1401 = vpop.f32.mrf.mxu0
        %1402 = vdwg.mxu0
        %v1403 = vmax.f32 %v893, 0.0
        %v1404 = vmax.f32 %v896, 0.0
        %v1405 = vmax.f32 %v901, 0.0
        %v1406 = vmax.f32 %v904, 0.0
        %v1407 = vmax.f32 %v909, 0.0
        %v1408 = vmax.f32 %v912, 0.0
        %v1409 = vmax.f32 %v917, 0.0
        %v1410 = vmax.f32 %v920, 0.0
        %v1411 = vmax.f32 %v925, 0.0
        %v1412 = vmax.f32 %v928, 0.0
        %v1413 = vmax.f32 %v933, 0.0
        %v1414 = vmax.f32 %v936, 0.0
        %v1415 = vmax.f32 %v941, 0.0
        %v1416 = vmax.f32 %v944, 0.0
        %v1417 = vmax.f32 %v949, 0.0
        %v1418 = vmax.f32 %v952, 0.0
        %v1419 = vmax.f32 %v957, 0.0
        %v1420 = vmax.f32 %v960, 0.0
        %v1421 = vmax.f32 %v965, 0.0
        %v1422 = vmax.f32 %v968, 0.0
        %v1423 = vmax.f32 %v973, 0.0
        %v1424 = vmax.f32 %v976, 0.0
        %v1425 = vmax.f32 %v981, 0.0
        %v1426 = vmax.f32 %v984, 0.0
        %v1427 = vmax.f32 %v989, 0.0
        %v1428 = vmax.f32 %v992, 0.0
        %v1429 = vmax.f32 %v997, 0.0
        %v1430 = vmax.f32 %v1000, 0.0
        %v1431 = vmax.f32 %v1005, 0.0
        %v1432 = vmax.f32 %v1008, 0.0
        %v1433 = vmax.f32 %v1013, 0.0
        %v1434 = vmax.f32 %v1016, 0.0
        %v1435 = vmax.f32 %v1021, 0.0
        %v1436 = vmax.f32 %v1024, 0.0
        %v1437 = vmax.f32 %v1029, 0.0
        %v1438 = vmax.f32 %v1032, 0.0
        %v1439 = vmax.f32 %v1037, 0.0
        %v1440 = vmax.f32 %v1040, 0.0
        %v1441 = vmax.f32 %v1045, 0.0
        %v1442 = vmax.f32 %v1048, 0.0
        %v1443 = vmax.f32 %v1053, 0.0
        %v1444 = vmax.f32 %v1056, 0.0
        %v1445 = vmax.f32 %v1061, 0.0
        %v1446 = vmax.f32 %v1064, 0.0
        %v1447 = vmax.f32 %v1069, 0.0
        %v1448 = vmax.f32 %v1072, 0.0
        %v1449 = vmax.f32 %v1077, 0.0
        %v1450 = vmax.f32 %v1080, 0.0
        %v1451 = vmax.f32 %v1085, 0.0
        %v1452 = vmax.f32 %v1088, 0.0
        %v1453 = vmax.f32 %v1093, 0.0
        %v1454 = vmax.f32 %v1096, 0.0
        %v1455 = vmax.f32 %v1101, 0.0
        %v1456 = vmax.f32 %v1104, 0.0
        %v1457 = vmax.f32 %v1109, 0.0
        %v1458 = vmax.f32 %v1112, 0.0
        %v1459 = vmax.f32 %v1117, 0.0
        %v1460 = vmax.f32 %v1120, 0.0
        %v1461 = vmax.f32 %v1125, 0.0
        %v1462 = vmax.f32 %v1128, 0.0
        %v1463 = vmax.f32 %v1133, 0.0
        %v1464 = vmax.f32 %v1136, 0.0
        %v1465 = vmax.f32 %v1141, 0.0
        %v1466 = vmax.f32 %v1144, 0.0
        %v1467 = vmax.f32 %v1149, 0.0
        %v1468 = vmax.f32 %v1152, 0.0
        %v1469 = vmax.f32 %v1157, 0.0
        %v1470 = vmax.f32 %v1160, 0.0
        %v1471 = vmax.f32 %v1165, 0.0
        %v1472 = vmax.f32 %v1168, 0.0
        %v1473 = vmax.f32 %v1173, 0.0
        %v1474 = vmax.f32 %v1176, 0.0
        %v1475 = vmax.f32 %v1181, 0.0
        %v1476 = vmax.f32 %v1184, 0.0
        %v1477 = vmax.f32 %v1189, 0.0
        %v1478 = vmax.f32 %v1192, 0.0
        %v1479 = vmax.f32 %v1197, 0.0
        %v1480 = vmax.f32 %v1200, 0.0
        %v1481 = vmax.f32 %v1205, 0.0
        %v1482 = vmax.f32 %v1208, 0.0
        %v1483 = vmax.f32 %v1213, 0.0
        %v1484 = vmax.f32 %v1216, 0.0
        %v1485 = vmax.f32 %v1221, 0.0
        %v1486 = vmax.f32 %v1224, 0.0
        %v1487 = vmax.f32 %v1229, 0.0
        %v1488 = vmax.f32 %v1232, 0.0
        %v1489 = vmax.f32 %v1237, 0.0
        %v1490 = vmax.f32 %v1240, 0.0
        %v1491 = vmax.f32 %v1245, 0.0
        %v1492 = vmax.f32 %v1248, 0.0
        %v1493 = vmax.f32 %v1253, 0.0
        %v1494 = vmax.f32 %v1256, 0.0
        %v1495 = vmax.f32 %v1261, 0.0
        %v1496 = vmax.f32 %v1264, 0.0
        %v1497 = vmax.f32 %v1269, 0.0
        %v1498 = vmax.f32 %v1272, 0.0
        %v1499 = vmax.f32 %v1277, 0.0
        %v1500 = vmax.f32 %v1280, 0.0
        %v1501 = vmax.f32 %v1285, 0.0
        %v1502 = vmax.f32 %v1288, 0.0
        %v1503 = vmax.f32 %v1293, 0.0
        %v1504 = vmax.f32 %v1296, 0.0
        %v1505 = vmax.f32 %v1301, 0.0
        %v1506 = vmax.f32 %v1304, 0.0
        %v1507 = vmax.f32 %v1309, 0.0
        %v1508 = vmax.f32 %v1312, 0.0
        %v1509 = vmax.f32 %v1317, 0.0
        %v1510 = vmax.f32 %v1320, 0.0
        %v1511 = vmax.f32 %v1325, 0.0
        %v1512 = vmax.f32 %v1328, 0.0
        %v1513 = vmax.f32 %v1333, 0.0
        %v1514 = vmax.f32 %v1336, 0.0
        %v1515 = vmax.f32 %v1341, 0.0
        %v1516 = vmax.f32 %v1344, 0.0
        %v1517 = vmax.f32 %v1349, 0.0
        %v1518 = vmax.f32 %v1352, 0.0
        %v1519 = vmax.f32 %v1357, 0.0
        %v1520 = vmax.f32 %v1360, 0.0
        %v1521 = vmax.f32 %v1365, 0.0
        %v1522 = vmax.f32 %v1368, 0.0
        %v1523 = vmax.f32 %v1373, 0.0
        %v1524 = vmax.f32 %v1376, 0.0
        %v1525 = vmax.f32 %v1381, 0.0
        %v1526 = vmax.f32 %v1384, 0.0
        %v1527 = vmax.f32 %v1389, 0.0
        %v1528 = vmax.f32 %v1392, 0.0
        %v1529 = vmax.f32 %v1397, 0.0
        %v1530 = vmax.f32 %v1400, 0.0
        %v1531 = vrot.slane %v1403, 4
        %v1532 = vmax.f32 %v1403, %v1531
        %v1533 = vrot.slane %v1532, 2
        %v1534 = vmax.f32 %v1532, %v1533
        %v1535 = vrot.slane %v1534, 1
        %v1536 = vmax.f32 %v1534, %v1535
        %v1537 = vrot.slane %v1404, 4
        %v1538 = vmax.f32 %v1404, %v1537
        %v1539 = vrot.slane %v1538, 2
        %v1540 = vmax.f32 %v1538, %v1539
        %v1541 = vrot.slane %v1540, 1
        %v1542 = vmax.f32 %v1540, %v1541
        %v1543 = vrot.slane %v1405, 4
        %v1544 = vmax.f32 %v1405, %v1543
        %v1545 = vrot.slane %v1544, 2
        %v1546 = vmax.f32 %v1544, %v1545
        %v1547 = vrot.slane %v1546, 1
        %v1548 = vmax.f32 %v1546, %v1547
        %v1549 = vrot.slane %v1406, 4
        %v1550 = vmax.f32 %v1406, %v1549
        %v1551 = vrot.slane %v1550, 2
        %v1552 = vmax.f32 %v1550, %v1551
        %v1553 = vrot.slane %v1552, 1
        %v1554 = vmax.f32 %v1552, %v1553
        %v1555 = vrot.slane %v1407, 4
        %v1556 = vmax.f32 %v1407, %v1555
        %v1557 = vrot.slane %v1556, 2
        %v1558 = vmax.f32 %v1556, %v1557
        %v1559 = vrot.slane %v1558, 1
        %v1560 = vmax.f32 %v1558, %v1559
        %v1561 = vrot.slane %v1408, 4
        %v1562 = vmax.f32 %v1408, %v1561
        %v1563 = vrot.slane %v1562, 2
        %v1564 = vmax.f32 %v1562, %v1563
        %v1565 = vrot.slane %v1564, 1
        %v1566 = vmax.f32 %v1564, %v1565
        %v1567 = vrot.slane %v1409, 4
        %v1568 = vmax.f32 %v1409, %v1567
        %v1569 = vrot.slane %v1568, 2
        %v1570 = vmax.f32 %v1568, %v1569
        %v1571 = vrot.slane %v1570, 1
        %v1572 = vmax.f32 %v1570, %v1571
        %v1573 = vrot.slane %v1410, 4
        %v1574 = vmax.f32 %v1410, %v1573
        %v1575 = vrot.slane %v1574, 2
        %v1576 = vmax.f32 %v1574, %v1575
        %v1577 = vrot.slane %v1576, 1
        %v1578 = vmax.f32 %v1576, %v1577
        %v1579 = vrot.slane %v1411, 4
        %v1580 = vmax.f32 %v1411, %v1579
        %v1581 = vrot.slane %v1580, 2
        %v1582 = vmax.f32 %v1580, %v1581
        %v1583 = vrot.slane %v1582, 1
        %v1584 = vmax.f32 %v1582, %v1583
        %v1585 = vrot.slane %v1412, 4
        %v1586 = vmax.f32 %v1412, %v1585
        %v1587 = vrot.slane %v1586, 2
        %v1588 = vmax.f32 %v1586, %v1587
        %v1589 = vrot.slane %v1588, 1
        %v1590 = vmax.f32 %v1588, %v1589
        %v1591 = vrot.slane %v1413, 4
        %v1592 = vmax.f32 %v1413, %v1591
        %v1593 = vrot.slane %v1592, 2
        %v1594 = vmax.f32 %v1592, %v1593
        %v1595 = vrot.slane %v1594, 1
        %v1596 = vmax.f32 %v1594, %v1595
        %v1597 = vrot.slane %v1414, 4
        %v1598 = vmax.f32 %v1414, %v1597
        %v1599 = vrot.slane %v1598, 2
        %v1600 = vmax.f32 %v1598, %v1599
        %v1601 = vrot.slane %v1600, 1
        %v1602 = vmax.f32 %v1600, %v1601
        %v1603 = vrot.slane %v1415, 4
        %v1604 = vmax.f32 %v1415, %v1603
        %v1605 = vrot.slane %v1604, 2
        %v1606 = vmax.f32 %v1604, %v1605
        %v1607 = vrot.slane %v1606, 1
        %v1608 = vmax.f32 %v1606, %v1607
        %v1609 = vrot.slane %v1416, 4
        %v1610 = vmax.f32 %v1416, %v1609
        %v1611 = vrot.slane %v1610, 2
        %v1612 = vmax.f32 %v1610, %v1611
        %v1613 = vrot.slane %v1612, 1
        %v1614 = vmax.f32 %v1612, %v1613
        %v1615 = vrot.slane %v1417, 4
        %v1616 = vmax.f32 %v1417, %v1615
        %v1617 = vrot.slane %v1616, 2
        %v1618 = vmax.f32 %v1616, %v1617
        %v1619 = vrot.slane %v1618, 1
        %v1620 = vmax.f32 %v1618, %v1619
        %v1621 = vrot.slane %v1418, 4
        %v1622 = vmax.f32 %v1418, %v1621
        %v1623 = vrot.slane %v1622, 2
        %v1624 = vmax.f32 %v1622, %v1623
        %v1625 = vrot.slane %v1624, 1
        %v1626 = vmax.f32 %v1624, %v1625
        %v1627 = vrot.slane %v1419, 4
        %v1628 = vmax.f32 %v1419, %v1627
        %v1629 = vrot.slane %v1628, 2
        %v1630 = vmax.f32 %v1628, %v1629
        %v1631 = vrot.slane %v1630, 1
        %v1632 = vmax.f32 %v1630, %v1631
        %v1633 = vrot.slane %v1420, 4
        %v1634 = vmax.f32 %v1420, %v1633
        %v1635 = vrot.slane %v1634, 2
        %v1636 = vmax.f32 %v1634, %v1635
        %v1637 = vrot.slane %v1636, 1
        %v1638 = vmax.f32 %v1636, %v1637
        %v1639 = vrot.slane %v1421, 4
        %v1640 = vmax.f32 %v1421, %v1639
        %v1641 = vrot.slane %v1640, 2
        %v1642 = vmax.f32 %v1640, %v1641
        %v1643 = vrot.slane %v1642, 1
        %v1644 = vmax.f32 %v1642, %v1643
        %v1645 = vrot.slane %v1422, 4
        %v1646 = vmax.f32 %v1422, %v1645
        %v1647 = vrot.slane %v1646, 2
        %v1648 = vmax.f32 %v1646, %v1647
        %v1649 = vrot.slane %v1648, 1
        %v1650 = vmax.f32 %v1648, %v1649
        %v1651 = vrot.slane %v1423, 4
        %v1652 = vmax.f32 %v1423, %v1651
        %v1653 = vrot.slane %v1652, 2
        %v1654 = vmax.f32 %v1652, %v1653
        %v1655 = vrot.slane %v1654, 1
        %v1656 = vmax.f32 %v1654, %v1655
        %v1657 = vrot.slane %v1424, 4
        %v1658 = vmax.f32 %v1424, %v1657
        %v1659 = vrot.slane %v1658, 2
        %v1660 = vmax.f32 %v1658, %v1659
        %v1661 = vrot.slane %v1660, 1
        %v1662 = vmax.f32 %v1660, %v1661
        %v1663 = vrot.slane %v1425, 4
        %v1664 = vmax.f32 %v1425, %v1663
        %v1665 = vrot.slane %v1664, 2
        %v1666 = vmax.f32 %v1664, %v1665
        %v1667 = vrot.slane %v1666, 1
        %v1668 = vmax.f32 %v1666, %v1667
        %v1669 = vrot.slane %v1426, 4
        %v1670 = vmax.f32 %v1426, %v1669
        %v1671 = vrot.slane %v1670, 2
        %v1672 = vmax.f32 %v1670, %v1671
        %v1673 = vrot.slane %v1672, 1
        %v1674 = vmax.f32 %v1672, %v1673
        %v1675 = vrot.slane %v1427, 4
        %v1676 = vmax.f32 %v1427, %v1675
        %v1677 = vrot.slane %v1676, 2
        %v1678 = vmax.f32 %v1676, %v1677
        %v1679 = vrot.slane %v1678, 1
        %v1680 = vmax.f32 %v1678, %v1679
        %v1681 = vrot.slane %v1428, 4
        %v1682 = vmax.f32 %v1428, %v1681
        %v1683 = vrot.slane %v1682, 2
        %v1684 = vmax.f32 %v1682, %v1683
        %v1685 = vrot.slane %v1684, 1
        %v1686 = vmax.f32 %v1684, %v1685
        %v1687 = vrot.slane %v1429, 4
        %v1688 = vmax.f32 %v1429, %v1687
        %v1689 = vrot.slane %v1688, 2
        %v1690 = vmax.f32 %v1688, %v1689
        %v1691 = vrot.slane %v1690, 1
        %v1692 = vmax.f32 %v1690, %v1691
        %v1693 = vrot.slane %v1430, 4
        %v1694 = vmax.f32 %v1430, %v1693
        %v1695 = vrot.slane %v1694, 2
        %v1696 = vmax.f32 %v1694, %v1695
        %v1697 = vrot.slane %v1696, 1
        %v1698 = vmax.f32 %v1696, %v1697
        %v1699 = vrot.slane %v1431, 4
        %v1700 = vmax.f32 %v1431, %v1699
        %v1701 = vrot.slane %v1700, 2
        %v1702 = vmax.f32 %v1700, %v1701
        %v1703 = vrot.slane %v1702, 1
        %v1704 = vmax.f32 %v1702, %v1703
        %v1705 = vrot.slane %v1432, 4
        %v1706 = vmax.f32 %v1432, %v1705
        %v1707 = vrot.slane %v1706, 2
        %v1708 = vmax.f32 %v1706, %v1707
        %v1709 = vrot.slane %v1708, 1
        %v1710 = vmax.f32 %v1708, %v1709
        %v1711 = vrot.slane %v1433, 4
        %v1712 = vmax.f32 %v1433, %v1711
        %v1713 = vrot.slane %v1712, 2
        %v1714 = vmax.f32 %v1712, %v1713
        %v1715 = vrot.slane %v1714, 1
        %v1716 = vmax.f32 %v1714, %v1715
        %v1717 = vrot.slane %v1434, 4
        %v1718 = vmax.f32 %v1434, %v1717
        %v1719 = vrot.slane %v1718, 2
        %v1720 = vmax.f32 %v1718, %v1719
        %v1721 = vrot.slane %v1720, 1
        %v1722 = vmax.f32 %v1720, %v1721
        %v1723 = vrot.slane %v1435, 4
        %v1724 = vmax.f32 %v1435, %v1723
        %v1725 = vrot.slane %v1724, 2
        %v1726 = vmax.f32 %v1724, %v1725
        %v1727 = vrot.slane %v1726, 1
        %v1728 = vmax.f32 %v1726, %v1727
        %v1729 = vrot.slane %v1436, 4
        %v1730 = vmax.f32 %v1436, %v1729
        %v1731 = vrot.slane %v1730, 2
        %v1732 = vmax.f32 %v1730, %v1731
        %v1733 = vrot.slane %v1732, 1
        %v1734 = vmax.f32 %v1732, %v1733
        %v1735 = vrot.slane %v1437, 4
        %v1736 = vmax.f32 %v1437, %v1735
        %v1737 = vrot.slane %v1736, 2
        %v1738 = vmax.f32 %v1736, %v1737
        %v1739 = vrot.slane %v1738, 1
        %v1740 = vmax.f32 %v1738, %v1739
        %v1741 = vrot.slane %v1438, 4
        %v1742 = vmax.f32 %v1438, %v1741
        %v1743 = vrot.slane %v1742, 2
        %v1744 = vmax.f32 %v1742, %v1743
        %v1745 = vrot.slane %v1744, 1
        %v1746 = vmax.f32 %v1744, %v1745
        %v1747 = vrot.slane %v1439, 4
        %v1748 = vmax.f32 %v1439, %v1747
        %v1749 = vrot.slane %v1748, 2
        %v1750 = vmax.f32 %v1748, %v1749
        %v1751 = vrot.slane %v1750, 1
        %v1752 = vmax.f32 %v1750, %v1751
        %v1753 = vrot.slane %v1440, 4
        %v1754 = vmax.f32 %v1440, %v1753
        %v1755 = vrot.slane %v1754, 2
        %v1756 = vmax.f32 %v1754, %v1755
        %v1757 = vrot.slane %v1756, 1
        %v1758 = vmax.f32 %v1756, %v1757
        %v1759 = vrot.slane %v1441, 4
        %v1760 = vmax.f32 %v1441, %v1759
        %v1761 = vrot.slane %v1760, 2
        %v1762 = vmax.f32 %v1760, %v1761
        %v1763 = vrot.slane %v1762, 1
        %v1764 = vmax.f32 %v1762, %v1763
        %v1765 = vrot.slane %v1442, 4
        %v1766 = vmax.f32 %v1442, %v1765
        %v1767 = vrot.slane %v1766, 2
        %v1768 = vmax.f32 %v1766, %v1767
        %v1769 = vrot.slane %v1768, 1
        %v1770 = vmax.f32 %v1768, %v1769
        %v1771 = vrot.slane %v1443, 4
        %v1772 = vmax.f32 %v1443, %v1771
        %v1773 = vrot.slane %v1772, 2
        %v1774 = vmax.f32 %v1772, %v1773
        %v1775 = vrot.slane %v1774, 1
        %v1776 = vmax.f32 %v1774, %v1775
        %v1777 = vrot.slane %v1444, 4
        %v1778 = vmax.f32 %v1444, %v1777
        %v1779 = vrot.slane %v1778, 2
        %v1780 = vmax.f32 %v1778, %v1779
        %v1781 = vrot.slane %v1780, 1
        %v1782 = vmax.f32 %v1780, %v1781
        %v1783 = vrot.slane %v1445, 4
        %v1784 = vmax.f32 %v1445, %v1783
        %v1785 = vrot.slane %v1784, 2
        %v1786 = vmax.f32 %v1784, %v1785
        %v1787 = vrot.slane %v1786, 1
        %v1788 = vmax.f32 %v1786, %v1787
        %v1789 = vrot.slane %v1446, 4
        %v1790 = vmax.f32 %v1446, %v1789
        %v1791 = vrot.slane %v1790, 2
        %v1792 = vmax.f32 %v1790, %v1791
        %v1793 = vrot.slane %v1792, 1
        %v1794 = vmax.f32 %v1792, %v1793
        %v1795 = vrot.slane %v1447, 4
        %v1796 = vmax.f32 %v1447, %v1795
        %v1797 = vrot.slane %v1796, 2
        %v1798 = vmax.f32 %v1796, %v1797
        %v1799 = vrot.slane %v1798, 1
        %v1800 = vmax.f32 %v1798, %v1799
        %v1801 = vrot.slane %v1448, 4
        %v1802 = vmax.f32 %v1448, %v1801
        %v1803 = vrot.slane %v1802, 2
        %v1804 = vmax.f32 %v1802, %v1803
        %v1805 = vrot.slane %v1804, 1
        %v1806 = vmax.f32 %v1804, %v1805
        %v1807 = vrot.slane %v1449, 4
        %v1808 = vmax.f32 %v1449, %v1807
        %v1809 = vrot.slane %v1808, 2
        %v1810 = vmax.f32 %v1808, %v1809
        %v1811 = vrot.slane %v1810, 1
        %v1812 = vmax.f32 %v1810, %v1811
        %v1813 = vrot.slane %v1450, 4
        %v1814 = vmax.f32 %v1450, %v1813
        %v1815 = vrot.slane %v1814, 2
        %v1816 = vmax.f32 %v1814, %v1815
        %v1817 = vrot.slane %v1816, 1
        %v1818 = vmax.f32 %v1816, %v1817
        %v1819 = vrot.slane %v1451, 4
        %v1820 = vmax.f32 %v1451, %v1819
        %v1821 = vrot.slane %v1820, 2
        %v1822 = vmax.f32 %v1820, %v1821
        %v1823 = vrot.slane %v1822, 1
        %v1824 = vmax.f32 %v1822, %v1823
        %v1825 = vrot.slane %v1452, 4
        %v1826 = vmax.f32 %v1452, %v1825
        %v1827 = vrot.slane %v1826, 2
        %v1828 = vmax.f32 %v1826, %v1827
        %v1829 = vrot.slane %v1828, 1
        %v1830 = vmax.f32 %v1828, %v1829
        %v1831 = vrot.slane %v1453, 4
        %v1832 = vmax.f32 %v1453, %v1831
        %v1833 = vrot.slane %v1832, 2
        %v1834 = vmax.f32 %v1832, %v1833
        %v1835 = vrot.slane %v1834, 1
        %v1836 = vmax.f32 %v1834, %v1835
        %v1837 = vrot.slane %v1454, 4
        %v1838 = vmax.f32 %v1454, %v1837
        %v1839 = vrot.slane %v1838, 2
        %v1840 = vmax.f32 %v1838, %v1839
        %v1841 = vrot.slane %v1840, 1
        %v1842 = vmax.f32 %v1840, %v1841
        %v1843 = vrot.slane %v1455, 4
        %v1844 = vmax.f32 %v1455, %v1843
        %v1845 = vrot.slane %v1844, 2
        %v1846 = vmax.f32 %v1844, %v1845
        %v1847 = vrot.slane %v1846, 1
        %v1848 = vmax.f32 %v1846, %v1847
        %v1849 = vrot.slane %v1456, 4
        %v1850 = vmax.f32 %v1456, %v1849
        %v1851 = vrot.slane %v1850, 2
        %v1852 = vmax.f32 %v1850, %v1851
        %v1853 = vrot.slane %v1852, 1
        %v1854 = vmax.f32 %v1852, %v1853
        %v1855 = vrot.slane %v1457, 4
        %v1856 = vmax.f32 %v1457, %v1855
        %v1857 = vrot.slane %v1856, 2
        %v1858 = vmax.f32 %v1856, %v1857
        %v1859 = vrot.slane %v1858, 1
        %v1860 = vmax.f32 %v1858, %v1859
        %v1861 = vrot.slane %v1458, 4
        %v1862 = vmax.f32 %v1458, %v1861
        %v1863 = vrot.slane %v1862, 2
        %v1864 = vmax.f32 %v1862, %v1863
        %v1865 = vrot.slane %v1864, 1
        %v1866 = vmax.f32 %v1864, %v1865
        %v1867 = vrot.slane %v1459, 4
        %v1868 = vmax.f32 %v1459, %v1867
        %v1869 = vrot.slane %v1868, 2
        %v1870 = vmax.f32 %v1868, %v1869
        %v1871 = vrot.slane %v1870, 1
        %v1872 = vmax.f32 %v1870, %v1871
        %v1873 = vrot.slane %v1460, 4
        %v1874 = vmax.f32 %v1460, %v1873
        %v1875 = vrot.slane %v1874, 2
        %v1876 = vmax.f32 %v1874, %v1875
        %v1877 = vrot.slane %v1876, 1
        %v1878 = vmax.f32 %v1876, %v1877
        %v1879 = vrot.slane %v1461, 4
        %v1880 = vmax.f32 %v1461, %v1879
        %v1881 = vrot.slane %v1880, 2
        %v1882 = vmax.f32 %v1880, %v1881
        %v1883 = vrot.slane %v1882, 1
        %v1884 = vmax.f32 %v1882, %v1883
        %v1885 = vrot.slane %v1462, 4
        %v1886 = vmax.f32 %v1462, %v1885
        %v1887 = vrot.slane %v1886, 2
        %v1888 = vmax.f32 %v1886, %v1887
        %v1889 = vrot.slane %v1888, 1
        %v1890 = vmax.f32 %v1888, %v1889
        %v1891 = vrot.slane %v1463, 4
        %v1892 = vmax.f32 %v1463, %v1891
        %v1893 = vrot.slane %v1892, 2
        %v1894 = vmax.f32 %v1892, %v1893
        %v1895 = vrot.slane %v1894, 1
        %v1896 = vmax.f32 %v1894, %v1895
        %v1897 = vrot.slane %v1464, 4
        %v1898 = vmax.f32 %v1464, %v1897
        %v1899 = vrot.slane %v1898, 2
        %v1900 = vmax.f32 %v1898, %v1899
        %v1901 = vrot.slane %v1900, 1
        %v1902 = vmax.f32 %v1900, %v1901
        %v1903 = vrot.slane %v1465, 4
        %v1904 = vmax.f32 %v1465, %v1903
        %v1905 = vrot.slane %v1904, 2
        %v1906 = vmax.f32 %v1904, %v1905
        %v1907 = vrot.slane %v1906, 1
        %v1908 = vmax.f32 %v1906, %v1907
        %v1909 = vrot.slane %v1466, 4
        %v1910 = vmax.f32 %v1466, %v1909
        %v1911 = vrot.slane %v1910, 2
        %v1912 = vmax.f32 %v1910, %v1911
        %v1913 = vrot.slane %v1912, 1
        %v1914 = vmax.f32 %v1912, %v1913
        %v1915 = vrot.slane %v1467, 4
        %v1916 = vmax.f32 %v1467, %v1915
        %v1917 = vrot.slane %v1916, 2
        %v1918 = vmax.f32 %v1916, %v1917
        %v1919 = vrot.slane %v1918, 1
        %v1920 = vmax.f32 %v1918, %v1919
        %v1921 = vrot.slane %v1468, 4
        %v1922 = vmax.f32 %v1468, %v1921
        %v1923 = vrot.slane %v1922, 2
        %v1924 = vmax.f32 %v1922, %v1923
        %v1925 = vrot.slane %v1924, 1
        %v1926 = vmax.f32 %v1924, %v1925
        %v1927 = vrot.slane %v1469, 4
        %v1928 = vmax.f32 %v1469, %v1927
        %v1929 = vrot.slane %v1928, 2
        %v1930 = vmax.f32 %v1928, %v1929
        %v1931 = vrot.slane %v1930, 1
        %v1932 = vmax.f32 %v1930, %v1931
        %v1933 = vrot.slane %v1470, 4
        %v1934 = vmax.f32 %v1470, %v1933
        %v1935 = vrot.slane %v1934, 2
        %v1936 = vmax.f32 %v1934, %v1935
        %v1937 = vrot.slane %v1936, 1
        %v1938 = vmax.f32 %v1936, %v1937
        %v1939 = vrot.slane %v1471, 4
        %v1940 = vmax.f32 %v1471, %v1939
        %v1941 = vrot.slane %v1940, 2
        %v1942 = vmax.f32 %v1940, %v1941
        %v1943 = vrot.slane %v1942, 1
        %v1944 = vmax.f32 %v1942, %v1943
        %v1945 = vrot.slane %v1472, 4
        %v1946 = vmax.f32 %v1472, %v1945
        %v1947 = vrot.slane %v1946, 2
        %v1948 = vmax.f32 %v1946, %v1947
        %v1949 = vrot.slane %v1948, 1
        %v1950 = vmax.f32 %v1948, %v1949
        %v1951 = vrot.slane %v1473, 4
        %v1952 = vmax.f32 %v1473, %v1951
        %v1953 = vrot.slane %v1952, 2
        %v1954 = vmax.f32 %v1952, %v1953
        %v1955 = vrot.slane %v1954, 1
        %v1956 = vmax.f32 %v1954, %v1955
        %v1957 = vrot.slane %v1474, 4
        %v1958 = vmax.f32 %v1474, %v1957
        %v1959 = vrot.slane %v1958, 2
        %v1960 = vmax.f32 %v1958, %v1959
        %v1961 = vrot.slane %v1960, 1
        %v1962 = vmax.f32 %v1960, %v1961
        %v1963 = vrot.slane %v1475, 4
        %v1964 = vmax.f32 %v1475, %v1963
        %v1965 = vrot.slane %v1964, 2
        %v1966 = vmax.f32 %v1964, %v1965
        %v1967 = vrot.slane %v1966, 1
        %v1968 = vmax.f32 %v1966, %v1967
        %v1969 = vrot.slane %v1476, 4
        %v1970 = vmax.f32 %v1476, %v1969
        %v1971 = vrot.slane %v1970, 2
        %v1972 = vmax.f32 %v1970, %v1971
        %v1973 = vrot.slane %v1972, 1
        %v1974 = vmax.f32 %v1972, %v1973
        %v1975 = vrot.slane %v1477, 4
        %v1976 = vmax.f32 %v1477, %v1975
        %v1977 = vrot.slane %v1976, 2
        %v1978 = vmax.f32 %v1976, %v1977
        %v1979 = vrot.slane %v1978, 1
        %v1980 = vmax.f32 %v1978, %v1979
        %v1981 = vrot.slane %v1478, 4
        %v1982 = vmax.f32 %v1478, %v1981
        %v1983 = vrot.slane %v1982, 2
        %v1984 = vmax.f32 %v1982, %v1983
        %v1985 = vrot.slane %v1984, 1
        %v1986 = vmax.f32 %v1984, %v1985
        %v1987 = vrot.slane %v1479, 4
        %v1988 = vmax.f32 %v1479, %v1987
        %v1989 = vrot.slane %v1988, 2
        %v1990 = vmax.f32 %v1988, %v1989
        %v1991 = vrot.slane %v1990, 1
        %v1992 = vmax.f32 %v1990, %v1991
        %v1993 = vrot.slane %v1480, 4
        %v1994 = vmax.f32 %v1480, %v1993
        %v1995 = vrot.slane %v1994, 2
        %v1996 = vmax.f32 %v1994, %v1995
        %v1997 = vrot.slane %v1996, 1
        %v1998 = vmax.f32 %v1996, %v1997
        %v1999 = vrot.slane %v1481, 4
        %v2000 = vmax.f32 %v1481, %v1999
        %v2001 = vrot.slane %v2000, 2
        %v2002 = vmax.f32 %v2000, %v2001
        %v2003 = vrot.slane %v2002, 1
        %v2004 = vmax.f32 %v2002, %v2003
        %v2005 = vrot.slane %v1482, 4
        %v2006 = vmax.f32 %v1482, %v2005
        %v2007 = vrot.slane %v2006, 2
        %v2008 = vmax.f32 %v2006, %v2007
        %v2009 = vrot.slane %v2008, 1
        %v2010 = vmax.f32 %v2008, %v2009
        %v2011 = vrot.slane %v1483, 4
        %v2012 = vmax.f32 %v1483, %v2011
        %v2013 = vrot.slane %v2012, 2
        %v2014 = vmax.f32 %v2012, %v2013
        %v2015 = vrot.slane %v2014, 1
        %v2016 = vmax.f32 %v2014, %v2015
        %v2017 = vrot.slane %v1484, 4
        %v2018 = vmax.f32 %v1484, %v2017
        %v2019 = vrot.slane %v2018, 2
        %v2020 = vmax.f32 %v2018, %v2019
        %v2021 = vrot.slane %v2020, 1
        %v2022 = vmax.f32 %v2020, %v2021
        %v2023 = vrot.slane %v1485, 4
        %v2024 = vmax.f32 %v1485, %v2023
        %v2025 = vrot.slane %v2024, 2
        %v2026 = vmax.f32 %v2024, %v2025
        %v2027 = vrot.slane %v2026, 1
        %v2028 = vmax.f32 %v2026, %v2027
        %v2029 = vrot.slane %v1486, 4
        %v2030 = vmax.f32 %v1486, %v2029
        %v2031 = vrot.slane %v2030, 2
        %v2032 = vmax.f32 %v2030, %v2031
        %v2033 = vrot.slane %v2032, 1
        %v2034 = vmax.f32 %v2032, %v2033
        %v2035 = vrot.slane %v1487, 4
        %v2036 = vmax.f32 %v1487, %v2035
        %v2037 = vrot.slane %v2036, 2
        %v2038 = vmax.f32 %v2036, %v2037
        %v2039 = vrot.slane %v2038, 1
        %v2040 = vmax.f32 %v2038, %v2039
        %v2041 = vrot.slane %v1488, 4
        %v2042 = vmax.f32 %v1488, %v2041
        %v2043 = vrot.slane %v2042, 2
        %v2044 = vmax.f32 %v2042, %v2043
        %v2045 = vrot.slane %v2044, 1
        %v2046 = vmax.f32 %v2044, %v2045
        %v2047 = vrot.slane %v1489, 4
        %v2048 = vmax.f32 %v1489, %v2047
        %v2049 = vrot.slane %v2048, 2
        %v2050 = vmax.f32 %v2048, %v2049
        %v2051 = vrot.slane %v2050, 1
        %v2052 = vmax.f32 %v2050, %v2051
        %v2053 = vrot.slane %v1490, 4
        %v2054 = vmax.f32 %v1490, %v2053
        %v2055 = vrot.slane %v2054, 2
        %v2056 = vmax.f32 %v2054, %v2055
        %v2057 = vrot.slane %v2056, 1
        %v2058 = vmax.f32 %v2056, %v2057
        %v2059 = vrot.slane %v1491, 4
        %v2060 = vmax.f32 %v1491, %v2059
        %v2061 = vrot.slane %v2060, 2
        %v2062 = vmax.f32 %v2060, %v2061
        %v2063 = vrot.slane %v2062, 1
        %v2064 = vmax.f32 %v2062, %v2063
        %v2065 = vrot.slane %v1492, 4
        %v2066 = vmax.f32 %v1492, %v2065
        %v2067 = vrot.slane %v2066, 2
        %v2068 = vmax.f32 %v2066, %v2067
        %v2069 = vrot.slane %v2068, 1
        %v2070 = vmax.f32 %v2068, %v2069
        %v2071 = vrot.slane %v1493, 4
        %v2072 = vmax.f32 %v1493, %v2071
        %v2073 = vrot.slane %v2072, 2
        %v2074 = vmax.f32 %v2072, %v2073
        %v2075 = vrot.slane %v2074, 1
        %v2076 = vmax.f32 %v2074, %v2075
        %v2077 = vrot.slane %v1494, 4
        %v2078 = vmax.f32 %v1494, %v2077
        %v2079 = vrot.slane %v2078, 2
        %v2080 = vmax.f32 %v2078, %v2079
        %v2081 = vrot.slane %v2080, 1
        %v2082 = vmax.f32 %v2080, %v2081
        %v2083 = vrot.slane %v1495, 4
        %v2084 = vmax.f32 %v1495, %v2083
        %v2085 = vrot.slane %v2084, 2
        %v2086 = vmax.f32 %v2084, %v2085
        %v2087 = vrot.slane %v2086, 1
        %v2088 = vmax.f32 %v2086, %v2087
        %v2089 = vrot.slane %v1496, 4
        %v2090 = vmax.f32 %v1496, %v2089
        %v2091 = vrot.slane %v2090, 2
        %v2092 = vmax.f32 %v2090, %v2091
        %v2093 = vrot.slane %v2092, 1
        %v2094 = vmax.f32 %v2092, %v2093
        %v2095 = vrot.slane %v1497, 4
        %v2096 = vmax.f32 %v1497, %v2095
        %v2097 = vrot.slane %v2096, 2
        %v2098 = vmax.f32 %v2096, %v2097
        %v2099 = vrot.slane %v2098, 1
        %v2100 = vmax.f32 %v2098, %v2099
        %v2101 = vrot.slane %v1498, 4
        %v2102 = vmax.f32 %v1498, %v2101
        %v2103 = vrot.slane %v2102, 2
        %v2104 = vmax.f32 %v2102, %v2103
        %v2105 = vrot.slane %v2104, 1
        %v2106 = vmax.f32 %v2104, %v2105
        %v2107 = vrot.slane %v1499, 4
        %v2108 = vmax.f32 %v1499, %v2107
        %v2109 = vrot.slane %v2108, 2
        %v2110 = vmax.f32 %v2108, %v2109
        %v2111 = vrot.slane %v2110, 1
        %v2112 = vmax.f32 %v2110, %v2111
        %v2113 = vrot.slane %v1500, 4
        %v2114 = vmax.f32 %v1500, %v2113
        %v2115 = vrot.slane %v2114, 2
        %v2116 = vmax.f32 %v2114, %v2115
        %v2117 = vrot.slane %v2116, 1
        %v2118 = vmax.f32 %v2116, %v2117
        %v2119 = vrot.slane %v1501, 4
        %v2120 = vmax.f32 %v1501, %v2119
        %v2121 = vrot.slane %v2120, 2
        %v2122 = vmax.f32 %v2120, %v2121
        %v2123 = vrot.slane %v2122, 1
        %v2124 = vmax.f32 %v2122, %v2123
        %v2125 = vrot.slane %v1502, 4
        %v2126 = vmax.f32 %v1502, %v2125
        %v2127 = vrot.slane %v2126, 2
        %v2128 = vmax.f32 %v2126, %v2127
        %v2129 = vrot.slane %v2128, 1
        %v2130 = vmax.f32 %v2128, %v2129
        %v2131 = vrot.slane %v1503, 4
        %v2132 = vmax.f32 %v1503, %v2131
        %v2133 = vrot.slane %v2132, 2
        %v2134 = vmax.f32 %v2132, %v2133
        %v2135 = vrot.slane %v2134, 1
        %v2136 = vmax.f32 %v2134, %v2135
        %v2137 = vrot.slane %v1504, 4
        %v2138 = vmax.f32 %v1504, %v2137
        %v2139 = vrot.slane %v2138, 2
        %v2140 = vmax.f32 %v2138, %v2139
        %v2141 = vrot.slane %v2140, 1
        %v2142 = vmax.f32 %v2140, %v2141
        %v2143 = vrot.slane %v1505, 4
        %v2144 = vmax.f32 %v1505, %v2143
        %v2145 = vrot.slane %v2144, 2
        %v2146 = vmax.f32 %v2144, %v2145
        %v2147 = vrot.slane %v2146, 1
        %v2148 = vmax.f32 %v2146, %v2147
        %v2149 = vrot.slane %v1506, 4
        %v2150 = vmax.f32 %v1506, %v2149
        %v2151 = vrot.slane %v2150, 2
        %v2152 = vmax.f32 %v2150, %v2151
        %v2153 = vrot.slane %v2152, 1
        %v2154 = vmax.f32 %v2152, %v2153
        %v2155 = vrot.slane %v1507, 4
        %v2156 = vmax.f32 %v1507, %v2155
        %v2157 = vrot.slane %v2156, 2
        %v2158 = vmax.f32 %v2156, %v2157
        %v2159 = vrot.slane %v2158, 1
        %v2160 = vmax.f32 %v2158, %v2159
        %v2161 = vrot.slane %v1508, 4
        %v2162 = vmax.f32 %v1508, %v2161
        %v2163 = vrot.slane %v2162, 2
        %v2164 = vmax.f32 %v2162, %v2163
        %v2165 = vrot.slane %v2164, 1
        %v2166 = vmax.f32 %v2164, %v2165
        %v2167 = vrot.slane %v1509, 4
        %v2168 = vmax.f32 %v1509, %v2167
        %v2169 = vrot.slane %v2168, 2
        %v2170 = vmax.f32 %v2168, %v2169
        %v2171 = vrot.slane %v2170, 1
        %v2172 = vmax.f32 %v2170, %v2171
        %v2173 = vrot.slane %v1510, 4
        %v2174 = vmax.f32 %v1510, %v2173
        %v2175 = vrot.slane %v2174, 2
        %v2176 = vmax.f32 %v2174, %v2175
        %v2177 = vrot.slane %v2176, 1
        %v2178 = vmax.f32 %v2176, %v2177
        %v2179 = vrot.slane %v1511, 4
        %v2180 = vmax.f32 %v1511, %v2179
        %v2181 = vrot.slane %v2180, 2
        %v2182 = vmax.f32 %v2180, %v2181
        %v2183 = vrot.slane %v2182, 1
        %v2184 = vmax.f32 %v2182, %v2183
        %v2185 = vrot.slane %v1512, 4
        %v2186 = vmax.f32 %v1512, %v2185
        %v2187 = vrot.slane %v2186, 2
        %v2188 = vmax.f32 %v2186, %v2187
        %v2189 = vrot.slane %v2188, 1
        %v2190 = vmax.f32 %v2188, %v2189
        %v2191 = vrot.slane %v1513, 4
        %v2192 = vmax.f32 %v1513, %v2191
        %v2193 = vrot.slane %v2192, 2
        %v2194 = vmax.f32 %v2192, %v2193
        %v2195 = vrot.slane %v2194, 1
        %v2196 = vmax.f32 %v2194, %v2195
        %v2197 = vrot.slane %v1514, 4
        %v2198 = vmax.f32 %v1514, %v2197
        %v2199 = vrot.slane %v2198, 2
        %v2200 = vmax.f32 %v2198, %v2199
        %v2201 = vrot.slane %v2200, 1
        %v2202 = vmax.f32 %v2200, %v2201
        %v2203 = vrot.slane %v1515, 4
        %v2204 = vmax.f32 %v1515, %v2203
        %v2205 = vrot.slane %v2204, 2
        %v2206 = vmax.f32 %v2204, %v2205
        %v2207 = vrot.slane %v2206, 1
        %v2208 = vmax.f32 %v2206, %v2207
        %v2209 = vrot.slane %v1516, 4
        %v2210 = vmax.f32 %v1516, %v2209
        %v2211 = vrot.slane %v2210, 2
        %v2212 = vmax.f32 %v2210, %v2211
        %v2213 = vrot.slane %v2212, 1
        %v2214 = vmax.f32 %v2212, %v2213
        %v2215 = vrot.slane %v1517, 4
        %v2216 = vmax.f32 %v1517, %v2215
        %v2217 = vrot.slane %v2216, 2
        %v2218 = vmax.f32 %v2216, %v2217
        %v2219 = vrot.slane %v2218, 1
        %v2220 = vmax.f32 %v2218, %v2219
        %v2221 = vrot.slane %v1518, 4
        %v2222 = vmax.f32 %v1518, %v2221
        %v2223 = vrot.slane %v2222, 2
        %v2224 = vmax.f32 %v2222, %v2223
        %v2225 = vrot.slane %v2224, 1
        %v2226 = vmax.f32 %v2224, %v2225
        %v2227 = vrot.slane %v1519, 4
        %v2228 = vmax.f32 %v1519, %v2227
        %v2229 = vrot.slane %v2228, 2
        %v2230 = vmax.f32 %v2228, %v2229
        %v2231 = vrot.slane %v2230, 1
        %v2232 = vmax.f32 %v2230, %v2231
        %v2233 = vrot.slane %v1520, 4
        %v2234 = vmax.f32 %v1520, %v2233
        %v2235 = vrot.slane %v2234, 2
        %v2236 = vmax.f32 %v2234, %v2235
        %v2237 = vrot.slane %v2236, 1
        %v2238 = vmax.f32 %v2236, %v2237
        %v2239 = vrot.slane %v1521, 4
        %v2240 = vmax.f32 %v1521, %v2239
        %v2241 = vrot.slane %v2240, 2
        %v2242 = vmax.f32 %v2240, %v2241
        %v2243 = vrot.slane %v2242, 1
        %v2244 = vmax.f32 %v2242, %v2243
        %v2245 = vrot.slane %v1522, 4
        %v2246 = vmax.f32 %v1522, %v2245
        %v2247 = vrot.slane %v2246, 2
        %v2248 = vmax.f32 %v2246, %v2247
        %v2249 = vrot.slane %v2248, 1
        %v2250 = vmax.f32 %v2248, %v2249
        %v2251 = vrot.slane %v1523, 4
        %v2252 = vmax.f32 %v1523, %v2251
        %v2253 = vrot.slane %v2252, 2
        %v2254 = vmax.f32 %v2252, %v2253
        %v2255 = vrot.slane %v2254, 1
        %v2256 = vmax.f32 %v2254, %v2255
        %v2257 = vrot.slane %v1524, 4
        %v2258 = vmax.f32 %v1524, %v2257
        %v2259 = vrot.slane %v2258, 2
        %v2260 = vmax.f32 %v2258, %v2259
        %v2261 = vrot.slane %v2260, 1
        %v2262 = vmax.f32 %v2260, %v2261
        %v2263 = vrot.slane %v1525, 4
        %v2264 = vmax.f32 %v1525, %v2263
        %v2265 = vrot.slane %v2264, 2
        %v2266 = vmax.f32 %v2264, %v2265
        %v2267 = vrot.slane %v2266, 1
        %v2268 = vmax.f32 %v2266, %v2267
        %v2269 = vrot.slane %v1526, 4
        %v2270 = vmax.f32 %v1526, %v2269
        %v2271 = vrot.slane %v2270, 2
        %v2272 = vmax.f32 %v2270, %v2271
        %v2273 = vrot.slane %v2272, 1
        %v2274 = vmax.f32 %v2272, %v2273
        %v2275 = vrot.slane %v1527, 4
        %v2276 = vmax.f32 %v1527, %v2275
        %v2277 = vrot.slane %v2276, 2
        %v2278 = vmax.f32 %v2276, %v2277
        %v2279 = vrot.slane %v2278, 1
        %v2280 = vmax.f32 %v2278, %v2279
        %v2281 = vrot.slane %v1528, 4
        %v2282 = vmax.f32 %v1528, %v2281
        %v2283 = vrot.slane %v2282, 2
        %v2284 = vmax.f32 %v2282, %v2283
        %v2285 = vrot.slane %v2284, 1
        %v2286 = vmax.f32 %v2284, %v2285
        %v2287 = vrot.slane %v1529, 4
        %v2288 = vmax.f32 %v1529, %v2287
        %v2289 = vrot.slane %v2288, 2
        %v2290 = vmax.f32 %v2288, %v2289
        %v2291 = vrot.slane %v2290, 1
        %v2292 = vmax.f32 %v2290, %v2291
        %v2293 = vrot.slane %v1530, 4
        %v2294 = vmax.f32 %v1530, %v2293
        %v2295 = vrot.slane %v2294, 2
        %v2296 = vmax.f32 %v2294, %v2295
        %v2297 = vrot.slane %v2296, 1
        %v2298 = vmax.f32 %v2296, %v2297
        %v2299 = vpack.c.bf16 %v1536, %v1536
        %v2300 = vpack.c.bf16 %v1542, %v1542
        %v2301 = vpack.c.bf16 %v1548, %v1548
        %v2302 = vpack.c.bf16 %v1554, %v1554
        %v2303 = vpack.c.bf16 %v1560, %v1560
        %v2304 = vpack.c.bf16 %v1566, %v1566
        %v2305 = vpack.c.bf16 %v1572, %v1572
        %v2306 = vpack.c.bf16 %v1578, %v1578
        %v2307 = vpack.c.bf16 %v1584, %v1584
        %v2308 = vpack.c.bf16 %v1590, %v1590
        %v2309 = vpack.c.bf16 %v1596, %v1596
        %v2310 = vpack.c.bf16 %v1602, %v1602
        %v2311 = vpack.c.bf16 %v1608, %v1608
        %v2312 = vpack.c.bf16 %v1614, %v1614
        %v2313 = vpack.c.bf16 %v1620, %v1620
        %v2314 = vpack.c.bf16 %v1626, %v1626
        %v2315 = vpack.c.bf16 %v1632, %v1632
        %v2316 = vpack.c.bf16 %v1638, %v1638
        %v2317 = vpack.c.bf16 %v1644, %v1644
        %v2318 = vpack.c.bf16 %v1650, %v1650
        %v2319 = vpack.c.bf16 %v1656, %v1656
        %v2320 = vpack.c.bf16 %v1662, %v1662
        %v2321 = vpack.c.bf16 %v1668, %v1668
        %v2322 = vpack.c.bf16 %v1674, %v1674
        %v2323 = vpack.c.bf16 %v1680, %v1680
        %v2324 = vpack.c.bf16 %v1686, %v1686
        %v2325 = vpack.c.bf16 %v1692, %v1692
        %v2326 = vpack.c.bf16 %v1698, %v1698
        %v2327 = vpack.c.bf16 %v1704, %v1704
        %v2328 = vpack.c.bf16 %v1710, %v1710
        %v2329 = vpack.c.bf16 %v1716, %v1716
        %v2330 = vpack.c.bf16 %v1722, %v1722
        %v2331 = vpack.c.bf16 %v1728, %v1728
        %v2332 = vpack.c.bf16 %v1734, %v1734
        %v2333 = vpack.c.bf16 %v1740, %v1740
        %v2334 = vpack.c.bf16 %v1746, %v1746
        %v2335 = vpack.c.bf16 %v1752, %v1752
        %v2336 = vpack.c.bf16 %v1758, %v1758
        %v2337 = vpack.c.bf16 %v1764, %v1764
        %v2338 = vpack.c.bf16 %v1770, %v1770
        %v2339 = vpack.c.bf16 %v1776, %v1776
        %v2340 = vpack.c.bf16 %v1782, %v1782
        %v2341 = vpack.c.bf16 %v1788, %v1788
        %v2342 = vpack.c.bf16 %v1794, %v1794
        %v2343 = vpack.c.bf16 %v1800, %v1800
        %v2344 = vpack.c.bf16 %v1806, %v1806
        %v2345 = vpack.c.bf16 %v1812, %v1812
        %v2346 = vpack.c.bf16 %v1818, %v1818
        %v2347 = vpack.c.bf16 %v1824, %v1824
        %v2348 = vpack.c.bf16 %v1830, %v1830
        %v2349 = vpack.c.bf16 %v1836, %v1836
        %v2350 = vpack.c.bf16 %v1842, %v1842
        %v2351 = vpack.c.bf16 %v1848, %v1848
        %v2352 = vpack.c.bf16 %v1854, %v1854
        %v2353 = vpack.c.bf16 %v1860, %v1860
        %v2354 = vpack.c.bf16 %v1866, %v1866
        %v2355 = vpack.c.bf16 %v1872, %v1872
        %v2356 = vpack.c.bf16 %v1878, %v1878
        %v2357 = vpack.c.bf16 %v1884, %v1884
        %v2358 = vpack.c.bf16 %v1890, %v1890
        %v2359 = vpack.c.bf16 %v1896, %v1896
        %v2360 = vpack.c.bf16 %v1902, %v1902
        %v2361 = vpack.c.bf16 %v1908, %v1908
        %v2362 = vpack.c.bf16 %v1914, %v1914
        %v2363 = vpack.c.bf16 %v1920, %v1920
        %v2364 = vpack.c.bf16 %v1926, %v1926
        %v2365 = vpack.c.bf16 %v1932, %v1932
        %v2366 = vpack.c.bf16 %v1938, %v1938
        %v2367 = vpack.c.bf16 %v1944, %v1944
        %v2368 = vpack.c.bf16 %v1950, %v1950
        %v2369 = vpack.c.bf16 %v1956, %v1956
        %v2370 = vpack.c.bf16 %v1962, %v1962
        %v2371 = vpack.c.bf16 %v1968, %v1968
        %v2372 = vpack.c.bf16 %v1974, %v1974
        %v2373 = vpack.c.bf16 %v1980, %v1980
        %v2374 = vpack.c.bf16 %v1986, %v1986
        %v2375 = vpack.c.bf16 %v1992, %v1992
        %v2376 = vpack.c.bf16 %v1998, %v1998
        %v2377 = vpack.c.bf16 %v2004, %v2004
        %v2378 = vpack.c.bf16 %v2010, %v2010
        %v2379 = vpack.c.bf16 %v2016, %v2016
        %v2380 = vpack.c.bf16 %v2022, %v2022
        %v2381 = vpack.c.bf16 %v2028, %v2028
        %v2382 = vpack.c.bf16 %v2034, %v2034
        %v2383 = vpack.c.bf16 %v2040, %v2040
        %v2384 = vpack.c.bf16 %v2046, %v2046
        %v2385 = vpack.c.bf16 %v2052, %v2052
        %v2386 = vpack.c.bf16 %v2058, %v2058
        %v2387 = vpack.c.bf16 %v2064, %v2064
        %v2388 = vpack.c.bf16 %v2070, %v2070
        %v2389 = vpack.c.bf16 %v2076, %v2076
        %v2390 = vpack.c.bf16 %v2082, %v2082
        %v2391 = vpack.c.bf16 %v2088, %v2088
        %v2392 = vpack.c.bf16 %v2094, %v2094
        %v2393 = vpack.c.bf16 %v2100, %v2100
        %v2394 = vpack.c.bf16 %v2106, %v2106
        %v2395 = vpack.c.bf16 %v2112, %v2112
        %v2396 = vpack.c.bf16 %v2118, %v2118
        %v2397 = vpack.c.bf16 %v2124, %v2124
        %v2398 = vpack.c.bf16 %v2130, %v2130
        %v2399 = vpack.c.bf16 %v2136, %v2136
        %v2400 = vpack.c.bf16 %v2142, %v2142
        %v2401 = vpack.c.bf16 %v2148, %v2148
        %v2402 = vpack.c.bf16 %v2154, %v2154
        %v2403 = vpack.c.bf16 %v2160, %v2160
        %v2404 = vpack.c.bf16 %v2166, %v2166
        %v2405 = vpack.c.bf16 %v2172, %v2172
        %v2406 = vpack.c.bf16 %v2178, %v2178
        %v2407 = vpack.c.bf16 %v2184, %v2184
        %v2408 = vpack.c.bf16 %v2190, %v2190
        %v2409 = vpack.c.bf16 %v2196, %v2196
        %v2410 = vpack.c.bf16 %v2202, %v2202
        %v2411 = vpack.c.bf16 %v2208, %v2208
        %v2412 = vpack.c.bf16 %v2214, %v2214
        %v2413 = vpack.c.bf16 %v2220, %v2220
        %v2414 = vpack.c.bf16 %v2226, %v2226
        %v2415 = vpack.c.bf16 %v2232, %v2232
        %v2416 = vpack.c.bf16 %v2238, %v2238
        %v2417 = vpack.c.bf16 %v2244, %v2244
        %v2418 = vpack.c.bf16 %v2250, %v2250
        %v2419 = vpack.c.bf16 %v2256, %v2256
        %v2420 = vpack.c.bf16 %v2262, %v2262
        %v2421 = vpack.c.bf16 %v2268, %v2268
        %v2422 = vpack.c.bf16 %v2274, %v2274
        %v2423 = vpack.c.bf16 %v2280, %v2280
        %v2424 = vpack.c.bf16 %v2286, %v2286
        %v2425 = vpack.c.bf16 %v2292, %v2292
        %v2426 = vpack.c.bf16 %v2298, %v2298
        %v2427 = vld [vmem:[#allocation7] sm:$0xf]
        %v2428 = vld [vmem:[#allocation7 + $0x4] sm:$0xf]
        %v2429 = vld [vmem:[#allocation7 + $0x8] sm:$0xf]
        %v2430 = vld [vmem:[#allocation7 + $0xc] sm:$0xf]
        %v2431 = vld [vmem:[#allocation7 + $0x10] sm:$0xf]
        %v2432 = vld [vmem:[#allocation7 + $0x14] sm:$0xf]
        %v2433 = vld [vmem:[#allocation7 + $0x18] sm:$0xf]
        %v2434 = vld [vmem:[#allocation7 + $0x1c] sm:$0xf]
        %v2435 = vld [vmem:[#allocation7 + $0x20] sm:$0xf]
        %v2436 = vld [vmem:[#allocation7 + $0x24] sm:$0xf]
        %v2437 = vld [vmem:[#allocation7 + $0x28] sm:$0xf]
        %v2438 = vld [vmem:[#allocation7 + $0x2c] sm:$0xf]
        %v2439 = vld [vmem:[#allocation7 + $0x30] sm:$0xf]
        %v2440 = vld [vmem:[#allocation7 + $0x34] sm:$0xf]
        %v2441 = vld [vmem:[#allocation7 + $0x38] sm:$0xf]
        %v2442 = vld [vmem:[#allocation7 + $0x3c] sm:$0xf]
        %v2443 = vld [vmem:[%s4] sm:$0x1]
        %v2445 = vlaneseq
        %v2446 = vshrl.u32 %v2445, 7
        %v2447 = vsub.s32 0, %v2446
        %v2448 = vrot.slane %v2443, %v2447
        %v2578 = vunpack.c.l.b16 %v2299
        %v2579 = vunpack.c.l.b16 %v2300
        %v2580 = vunpack.c.l.b16 %v2301
        %v2581 = vunpack.c.l.b16 %v2302
        %v2582 = vunpack.c.l.b16 %v2303
        %v2583 = vunpack.c.l.b16 %v2304
        %v2584 = vunpack.c.l.b16 %v2305
        %v2585 = vunpack.c.l.b16 %v2306
        %v2586 = vunpack.c.l.b16 %v2307
        %v2587 = vunpack.c.l.b16 %v2308
        %v2588 = vunpack.c.l.b16 %v2309
        %v2589 = vunpack.c.l.b16 %v2310
        %v2590 = vunpack.c.l.b16 %v2311
        %v2591 = vunpack.c.l.b16 %v2312
        %v2592 = vunpack.c.l.b16 %v2313
        %v2593 = vunpack.c.l.b16 %v2314
        %v2594 = vunpack.c.l.b16 %v2315
        %v2595 = vunpack.c.l.b16 %v2316
        %v2596 = vunpack.c.l.b16 %v2317
        %v2597 = vunpack.c.l.b16 %v2318
        %v2598 = vunpack.c.l.b16 %v2319
        %v2599 = vunpack.c.l.b16 %v2320
        %v2600 = vunpack.c.l.b16 %v2321
        %v2601 = vunpack.c.l.b16 %v2322
        %v2602 = vunpack.c.l.b16 %v2323
        %v2603 = vunpack.c.l.b16 %v2324
        %v2604 = vunpack.c.l.b16 %v2325
        %v2605 = vunpack.c.l.b16 %v2326
        %v2606 = vunpack.c.l.b16 %v2327
        %v2607 = vunpack.c.l.b16 %v2328
        %v2608 = vunpack.c.l.b16 %v2329
        %v2609 = vunpack.c.l.b16 %v2330
        %v2610 = vunpack.c.l.b16 %v2331
        %v2611 = vunpack.c.l.b16 %v2332
        %v2612 = vunpack.c.l.b16 %v2333
        %v2613 = vunpack.c.l.b16 %v2334
        %v2614 = vunpack.c.l.b16 %v2335
        %v2615 = vunpack.c.l.b16 %v2336
        %v2616 = vunpack.c.l.b16 %v2337
        %v2617 = vunpack.c.l.b16 %v2338
        %v2618 = vunpack.c.l.b16 %v2339
        %v2619 = vunpack.c.l.b16 %v2340
        %v2620 = vunpack.c.l.b16 %v2341
        %v2621 = vunpack.c.l.b16 %v2342
        %v2622 = vunpack.c.l.b16 %v2343
        %v2623 = vunpack.c.l.b16 %v2344
        %v2624 = vunpack.c.l.b16 %v2345
        %v2625 = vunpack.c.l.b16 %v2346
        %v2626 = vunpack.c.l.b16 %v2347
        %v2627 = vunpack.c.l.b16 %v2348
        %v2628 = vunpack.c.l.b16 %v2349
        %v2629 = vunpack.c.l.b16 %v2350
        %v2630 = vunpack.c.l.b16 %v2351
        %v2631 = vunpack.c.l.b16 %v2352
        %v2632 = vunpack.c.l.b16 %v2353
        %v2633 = vunpack.c.l.b16 %v2354
        %v2634 = vunpack.c.l.b16 %v2355
        %v2635 = vunpack.c.l.b16 %v2356
        %v2636 = vunpack.c.l.b16 %v2357
        %v2637 = vunpack.c.l.b16 %v2358
        %v2638 = vunpack.c.l.b16 %v2359
        %v2639 = vunpack.c.l.b16 %v2360
        %v2640 = vunpack.c.l.b16 %v2361
        %v2641 = vunpack.c.l.b16 %v2362
        %v2642 = vunpack.c.l.b16 %v2363
        %v2643 = vunpack.c.l.b16 %v2364
        %v2644 = vunpack.c.l.b16 %v2365
        %v2645 = vunpack.c.l.b16 %v2366
        %v2646 = vunpack.c.l.b16 %v2367
        %v2647 = vunpack.c.l.b16 %v2368
        %v2648 = vunpack.c.l.b16 %v2369
        %v2649 = vunpack.c.l.b16 %v2370
        %v2650 = vunpack.c.l.b16 %v2371
        %v2651 = vunpack.c.l.b16 %v2372
        %v2652 = vunpack.c.l.b16 %v2373
        %v2653 = vunpack.c.l.b16 %v2374
        %v2654 = vunpack.c.l.b16 %v2375
        %v2655 = vunpack.c.l.b16 %v2376
        %v2656 = vunpack.c.l.b16 %v2377
        %v2657 = vunpack.c.l.b16 %v2378
        %v2658 = vunpack.c.l.b16 %v2379
        %v2659 = vunpack.c.l.b16 %v2380
        %v2660 = vunpack.c.l.b16 %v2381
        %v2661 = vunpack.c.l.b16 %v2382
        %v2662 = vunpack.c.l.b16 %v2383
        %v2663 = vunpack.c.l.b16 %v2384
        %v2664 = vunpack.c.l.b16 %v2385
        %v2665 = vunpack.c.l.b16 %v2386
        %v2666 = vunpack.c.l.b16 %v2387
        %v2667 = vunpack.c.l.b16 %v2388
        %v2668 = vunpack.c.l.b16 %v2389
        %v2669 = vunpack.c.l.b16 %v2390
        %v2670 = vunpack.c.l.b16 %v2391
        %v2671 = vunpack.c.l.b16 %v2392
        %v2672 = vunpack.c.l.b16 %v2393
        %v2673 = vunpack.c.l.b16 %v2394
        %v2674 = vunpack.c.l.b16 %v2395
        %v2675 = vunpack.c.l.b16 %v2396
        %v2676 = vunpack.c.l.b16 %v2397
        %v2677 = vunpack.c.l.b16 %v2398
        %v2678 = vunpack.c.l.b16 %v2399
        %v2679 = vunpack.c.l.b16 %v2400
        %v2680 = vunpack.c.l.b16 %v2401
        %v2681 = vunpack.c.l.b16 %v2402
        %v2682 = vunpack.c.l.b16 %v2403
        %v2683 = vunpack.c.l.b16 %v2404
        %v2684 = vunpack.c.l.b16 %v2405
        %v2685 = vunpack.c.l.b16 %v2406
        %v2686 = vunpack.c.l.b16 %v2407
        %v2687 = vunpack.c.l.b16 %v2408
        %v2688 = vunpack.c.l.b16 %v2409
        %v2689 = vunpack.c.l.b16 %v2410
        %v2690 = vunpack.c.l.b16 %v2411
        %v2691 = vunpack.c.l.b16 %v2412
        %v2692 = vunpack.c.l.b16 %v2413
        %v2693 = vunpack.c.l.b16 %v2414
        %v2694 = vunpack.c.l.b16 %v2415
        %v2695 = vunpack.c.l.b16 %v2416
        %v2696 = vunpack.c.l.b16 %v2417
        %v2697 = vunpack.c.l.b16 %v2418
        %v2698 = vunpack.c.l.b16 %v2419
        %v2699 = vunpack.c.l.b16 %v2420
        %v2700 = vunpack.c.l.b16 %v2421
        %v2701 = vunpack.c.l.b16 %v2422
        %v2702 = vunpack.c.l.b16 %v2423
        %v2703 = vunpack.c.l.b16 %v2424
        %v2704 = vunpack.c.l.b16 %v2425
        %v2705 = vunpack.c.l.b16 %v2426
        %vm2706 = vcmask 1041409
        %v2707 = vsel %vm2706, %v2579, %v2578
        %vm2708 = vcmask 1042434
        %v2709 = vsel %vm2708, %v2580, %v2707
        %vm2710 = vcmask 1043459
        %v2711 = vsel %vm2710, %v2581, %v2709
        %vm2712 = vcmask 1044484
        %v2713 = vsel %vm2712, %v2582, %v2711
        %vm2714 = vcmask 1045509
        %v2715 = vsel %vm2714, %v2583, %v2713
        %vm2716 = vcmask 1046534
        %v2717 = vsel %vm2716, %v2584, %v2715
        %vm2718 = vcmask 1047559
        %v2719 = vsel %vm2718, %v2585, %v2717
        %v2720 = vsel %vm2706, %v2587, %v2586
        %v2721 = vsel %vm2708, %v2588, %v2720
        %v2722 = vsel %vm2710, %v2589, %v2721
        %v2723 = vsel %vm2712, %v2590, %v2722
        %v2724 = vsel %vm2714, %v2591, %v2723
        %v2725 = vsel %vm2716, %v2592, %v2724
        %v2726 = vsel %vm2718, %v2593, %v2725
        %v2727 = vsel %vm2706, %v2595, %v2594
        %v2728 = vsel %vm2708, %v2596, %v2727
        %v2729 = vsel %vm2710, %v2597, %v2728
        %v2730 = vsel %vm2712, %v2598, %v2729
        %v2731 = vsel %vm2714, %v2599, %v2730
        %v2732 = vsel %vm2716, %v2600, %v2731
        %v2733 = vsel %vm2718, %v2601, %v2732
        %v2734 = vsel %vm2706, %v2603, %v2602
        %v2735 = vsel %vm2708, %v2604, %v2734
        %v2736 = vsel %vm2710, %v2605, %v2735
        %v2737 = vsel %vm2712, %v2606, %v2736
        %v2738 = vsel %vm2714, %v2607, %v2737
        %v2739 = vsel %vm2716, %v2608, %v2738
        %v2740 = vsel %vm2718, %v2609, %v2739
        %v2741 = vsel %vm2706, %v2611, %v2610
        %v2742 = vsel %vm2708, %v2612, %v2741
        %v2743 = vsel %vm2710, %v2613, %v2742
        %v2744 = vsel %vm2712, %v2614, %v2743
        %v2745 = vsel %vm2714, %v2615, %v2744
        %v2746 = vsel %vm2716, %v2616, %v2745
        %v2747 = vsel %vm2718, %v2617, %v2746
        %v2748 = vsel %vm2706, %v2619, %v2618
        %v2749 = vsel %vm2708, %v2620, %v2748
        %v2750 = vsel %vm2710, %v2621, %v2749
        %v2751 = vsel %vm2712, %v2622, %v2750
        %v2752 = vsel %vm2714, %v2623, %v2751
        %v2753 = vsel %vm2716, %v2624, %v2752
        %v2754 = vsel %vm2718, %v2625, %v2753
        %v2755 = vsel %vm2706, %v2627, %v2626
        %v2756 = vsel %vm2708, %v2628, %v2755
        %v2757 = vsel %vm2710, %v2629, %v2756
        %v2758 = vsel %vm2712, %v2630, %v2757
        %v2759 = vsel %vm2714, %v2631, %v2758
        %v2760 = vsel %vm2716, %v2632, %v2759
        %v2761 = vsel %vm2718, %v2633, %v2760
        %v2762 = vsel %vm2706, %v2635, %v2634
        %v2763 = vsel %vm2708, %v2636, %v2762
        %v2764 = vsel %vm2710, %v2637, %v2763
        %v2765 = vsel %vm2712, %v2638, %v2764
        %v2766 = vsel %vm2714, %v2639, %v2765
        %v2767 = vsel %vm2716, %v2640, %v2766
        %v2768 = vsel %vm2718, %v2641, %v2767
        %v2769 = vsel %vm2706, %v2643, %v2642
        %v2770 = vsel %vm2708, %v2644, %v2769
        %v2771 = vsel %vm2710, %v2645, %v2770
        %v2772 = vsel %vm2712, %v2646, %v2771
        %v2773 = vsel %vm2714, %v2647, %v2772
        %v2774 = vsel %vm2716, %v2648, %v2773
        %v2775 = vsel %vm2718, %v2649, %v2774
        %v2776 = vsel %vm2706, %v2651, %v2650
        %v2777 = vsel %vm2708, %v2652, %v2776
        %v2778 = vsel %vm2710, %v2653, %v2777
        %v2779 = vsel %vm2712, %v2654, %v2778
        %v2780 = vsel %vm2714, %v2655, %v2779
        %v2781 = vsel %vm2716, %v2656, %v2780
        %v2782 = vsel %vm2718, %v2657, %v2781
        %v2783 = vsel %vm2706, %v2659, %v2658
        %v2784 = vsel %vm2708, %v2660, %v2783
        %v2785 = vsel %vm2710, %v2661, %v2784
        %v2786 = vsel %vm2712, %v2662, %v2785
        %v2787 = vsel %vm2714, %v2663, %v2786
        %v2788 = vsel %vm2716, %v2664, %v2787
        %v2789 = vsel %vm2718, %v2665, %v2788
        %v2790 = vsel %vm2706, %v2667, %v2666
        %v2791 = vsel %vm2708, %v2668, %v2790
        %v2792 = vsel %vm2710, %v2669, %v2791
        %v2793 = vsel %vm2712, %v2670, %v2792
        %v2794 = vsel %vm2714, %v2671, %v2793
        %v2795 = vsel %vm2716, %v2672, %v2794
        %v2796 = vsel %vm2718, %v2673, %v2795
        %v2797 = vsel %vm2706, %v2675, %v2674
        %v2798 = vsel %vm2708, %v2676, %v2797
        %v2799 = vsel %vm2710, %v2677, %v2798
        %v2800 = vsel %vm2712, %v2678, %v2799
        %v2801 = vsel %vm2714, %v2679, %v2800
        %v2802 = vsel %vm2716, %v2680, %v2801
        %v2803 = vsel %vm2718, %v2681, %v2802
        %v2804 = vsel %vm2706, %v2683, %v2682
        %v2805 = vsel %vm2708, %v2684, %v2804
        %v2806 = vsel %vm2710, %v2685, %v2805
        %v2807 = vsel %vm2712, %v2686, %v2806
        %v2808 = vsel %vm2714, %v2687, %v2807
        %v2809 = vsel %vm2716, %v2688, %v2808
        %v2810 = vsel %vm2718, %v2689, %v2809
        %v2811 = vsel %vm2706, %v2691, %v2690
        %v2812 = vsel %vm2708, %v2692, %v2811
        %v2813 = vsel %vm2710, %v2693, %v2812
        %v2814 = vsel %vm2712, %v2694, %v2813
        %v2815 = vsel %vm2714, %v2695, %v2814
        %v2816 = vsel %vm2716, %v2696, %v2815
        %v2817 = vsel %vm2718, %v2697, %v2816
        %v2818 = vsel %vm2706, %v2699, %v2698
        %v2819 = vsel %vm2708, %v2700, %v2818
        %v2820 = vsel %vm2710, %v2701, %v2819
        %v2821 = vsel %vm2712, %v2702, %v2820
        %v2822 = vsel %vm2714, %v2703, %v2821
        %v2823 = vsel %vm2716, %v2704, %v2822
        %v2824 = vsel %vm2718, %v2705, %v2823
        %v2825 = vpack.c.b16 %v2726, %v2719
        %v2826 = vpack.c.b16 %v2740, %v2733
        %v2827 = vpack.c.b16 %v2754, %v2747
        %v2828 = vpack.c.b16 %v2768, %v2761
        %v2829 = vpack.c.b16 %v2782, %v2775
        %v2830 = vpack.c.b16 %v2796, %v2789
        %v2831 = vpack.c.b16 %v2810, %v2803
        %v2832 = vpack.c.b16 %v2824, %v2817
        %v2857 = vunpack.c.l.b16 %v2427
        %v2858 = vunpack.c.l.b16 %v2428
        %v2859 = vunpack.c.l.b16 %v2429
        %v2860 = vunpack.c.l.b16 %v2430
        %v2861 = vunpack.c.l.b16 %v2431
        %v2862 = vunpack.c.l.b16 %v2432
        %v2863 = vunpack.c.l.b16 %v2433
        %v2864 = vunpack.c.l.b16 %v2434
        %v2865 = vunpack.c.l.b16 %v2435
        %v2866 = vunpack.c.l.b16 %v2436
        %v2867 = vunpack.c.l.b16 %v2437
        %v2868 = vunpack.c.l.b16 %v2438
        %v2869 = vunpack.c.l.b16 %v2439
        %v2870 = vunpack.c.l.b16 %v2440
        %v2871 = vunpack.c.l.b16 %v2441
        %v2872 = vunpack.c.l.b16 %v2442
        %v2873 = vpack.c.b16 %v2858, %v2857
        %v2874 = vpack.c.b16 %v2860, %v2859
        %v2875 = vpack.c.b16 %v2862, %v2861
        %v2876 = vpack.c.b16 %v2864, %v2863
        %v2877 = vpack.c.b16 %v2866, %v2865
        %v2878 = vpack.c.b16 %v2868, %v2867
        %v2879 = vpack.c.b16 %v2870, %v2869
        %v2880 = vpack.c.b16 %v2872, %v2871
        %2889 = vmatprep.subr.bf16.mxu0 0
        %2890 = vmatpush1.bf16.msra.mxu0 %v2880
        %2891 = vmatprep.subr.bf16.mxu0 0
        %2892 = vmatpush1.bf16.msra.mxu0 %v2879
        %2893 = vmatprep.subr.bf16.mxu0 0
        %2894 = vmatpush1.bf16.msra.mxu0 %v2878
        %2895 = vmatprep.subr.bf16.mxu0 0
        %2896 = vmatpush1.bf16.msra.mxu0 %v2877
        %2897 = vmatprep.subr.bf16.mxu0 0
        %2898 = vmatpush1.bf16.msra.mxu0 %v2876
        %2899 = vmatprep.subr.bf16.mxu0 0
        %2900 = vmatpush1.bf16.msra.mxu0 %v2875
        %2901 = vmatprep.subr.bf16.mxu0 0
        %2902 = vmatpush1.bf16.msra.mxu0 %v2874
        %2903 = vmatprep.subr.bf16.mxu0 0
        %2904 = vmatpush1.bf16.msra.mxu0 %v2873
        %2905 = vmatprep.subr.bf16.mxu0 0
        %2906 = vmatpush2.bf16.msra.mxu0 0
        %2907 = vmatprep.subr.bf16.mxu0 0
        %2908 = vmatpush2.bf16.msra.mxu0 0
        %2909 = vmatprep.subr.bf16.mxu0 0
        %2910 = vmatpush2.bf16.msra.mxu0 0
        %2911 = vmatprep.subr.bf16.mxu0 0
        %2912 = vmatpush2.bf16.msra.mxu0 0
        %2913 = vmatprep.subr.bf16.mxu0 0
        %2914 = vmatpush2.bf16.msra.mxu0 0
        %2915 = vmatprep.subr.bf16.mxu0 0
        %2916 = vmatpush2.bf16.msra.mxu0 0
        %2917 = vmatprep.subr.bf16.mxu0 0
        %2918 = vmatpush2.bf16.msra.mxu0 0
        %2919 = vmatprep.subr.bf16.mxu0 0
        %2920 = vmatpush2.bf16.msra.mxu0 0
        %2921 = vmatprep.mubr.bf16.mxu0 0
        %2922 = vmatmul.mubr.bf16.gmra.mxu0 %v2825
        %v2923 = vpop.f32.mrf.mxu0
        %v2924 = vadd.f32 %v2448, %v2923
        %v2925 = vpop.f32.mrf.mxu0
        %v2926 = vpop.f32.mrf.mxu0
        %v2927 = vadd.f32 %v2448, %v2926
        %v2928 = vpop.f32.mrf.mxu0
        %2929 = vmatprep.mubr.bf16.mxu0 0
        %2930 = vmatmul.mubr.bf16.gmra.mxu0 %v2826
        %v2931 = vpop.f32.mrf.mxu0
        %v2932 = vadd.f32 %v2448, %v2931
        %v2933 = vpop.f32.mrf.mxu0
        %v2934 = vpop.f32.mrf.mxu0
        %v2935 = vadd.f32 %v2448, %v2934
        %v2936 = vpop.f32.mrf.mxu0
        %2937 = vmatprep.mubr.bf16.mxu0 0
        %2938 = vmatmul.mubr.bf16.gmra.mxu0 %v2827
        %v2939 = vpop.f32.mrf.mxu0
        %v2940 = vadd.f32 %v2448, %v2939
        %v2941 = vpop.f32.mrf.mxu0
        %v2942 = vpop.f32.mrf.mxu0
        %v2943 = vadd.f32 %v2448, %v2942
        %v2944 = vpop.f32.mrf.mxu0
        %2945 = vmatprep.mubr.bf16.mxu0 0
        %2946 = vmatmul.mubr.bf16.gmra.mxu0 %v2828
        %v2947 = vpop.f32.mrf.mxu0
        %v2948 = vadd.f32 %v2448, %v2947
        %v2949 = vpop.f32.mrf.mxu0
        %v2950 = vpop.f32.mrf.mxu0
        %v2951 = vadd.f32 %v2448, %v2950
        %v2952 = vpop.f32.mrf.mxu0
        %2953 = vmatprep.mubr.bf16.mxu0 0
        %2954 = vmatmul.mubr.bf16.gmra.mxu0 %v2829
        %v2955 = vpop.f32.mrf.mxu0
        %v2956 = vadd.f32 %v2448, %v2955
        %v2957 = vpop.f32.mrf.mxu0
        %v2958 = vpop.f32.mrf.mxu0
        %v2959 = vadd.f32 %v2448, %v2958
        %v2960 = vpop.f32.mrf.mxu0
        %2961 = vmatprep.mubr.bf16.mxu0 0
        %2962 = vmatmul.mubr.bf16.gmra.mxu0 %v2830
        %v2963 = vpop.f32.mrf.mxu0
        %v2964 = vadd.f32 %v2448, %v2963
        %v2965 = vpop.f32.mrf.mxu0
        %v2966 = vpop.f32.mrf.mxu0
        %v2967 = vadd.f32 %v2448, %v2966
        %v2968 = vpop.f32.mrf.mxu0
        %2969 = vmatprep.mubr.bf16.mxu0 0
        %2970 = vmatmul.mubr.bf16.gmra.mxu0 %v2831
        %v2971 = vpop.f32.mrf.mxu0
        %v2972 = vadd.f32 %v2448, %v2971
        %v2973 = vpop.f32.mrf.mxu0
        %v2974 = vpop.f32.mrf.mxu0
        %v2975 = vadd.f32 %v2448, %v2974
        %v2976 = vpop.f32.mrf.mxu0
        %2977 = vmatprep.mubr.bf16.mxu0 0
        %2978 = vmatmul.mubr.bf16.gmra.mxu0 %v2832
        %v2979 = vpop.f32.mrf.mxu0
        %v2980 = vadd.f32 %v2448, %v2979
        %v2981 = vpop.f32.mrf.mxu0
        %v2982 = vpop.f32.mrf.mxu0
        %v2983 = vadd.f32 %v2448, %v2982
        %v2984 = vpop.f32.mrf.mxu0
        %2985 = vdwg.mxu0
        %2986 = vst [vmem:[%s271] sm:$0xff] %v2924
        %2987 = vst [vmem:[%s271 + $0x8] sm:$0xff] %v2927
        %2988 = vst [vmem:[%s271 + $0x10] sm:$0xff] %v2932
        %2989 = vst [vmem:[%s271 + $0x18] sm:$0xff] %v2935
        %2990 = vst [vmem:[%s271 + $0x20] sm:$0xff] %v2940
        %2991 = vst [vmem:[%s271 + $0x28] sm:$0xff] %v2943
        %2992 = vst [vmem:[%s271 + $0x30] sm:$0xff] %v2948
        %2993 = vst [vmem:[%s271 + $0x38] sm:$0xff] %v2951
        %2994 = vst [vmem:[%s271 + $0x40] sm:$0xff] %v2956
        %2995 = vst [vmem:[%s271 + $0x48] sm:$0xff] %v2959
        %2996 = vst [vmem:[%s271 + $0x50] sm:$0xff] %v2964
        %2997 = vst [vmem:[%s271 + $0x58] sm:$0xff] %v2967
        %2998 = vst [vmem:[%s271 + $0x60] sm:$0xff] %v2972
        %2999 = vst [vmem:[%s271 + $0x68] sm:$0xff] %v2975
        %3000 = vst [vmem:[%s271 + $0x70] sm:$0xff] %v2980
        %3001 = vst [vmem:[%s271 + $0x78] sm:$0xff] %v2983
        %s3002 = sand.u32 %s141, 1
        %s3003 = scalar_lea.sflag [#allocation4], %s3002
        %s3004 = sand.u32 %s141, 1
        %s3005 = smul.addr %s3004, 128
        %s3006 = scalar_lea.vmem [#allocation8], %s3005
        // Predicated region
        $region53: #{tpu_custom_call.1} parent=39 // pred_check
          %p3007 = pneg %p151
        $region54: #{tpu_custom_call.1} parent=39 // pred_check_branch
          %3009 = sbr.rel (%p3007) target = $region56
        $region55: #{tpu_custom_call.1} parent=39 // pred_region
          %s3010 = smul.u32 16, %s23
          %s3012 = ssub.s32 2048, 2048
          %3013 = vsyncadd %s3003, %s3012
          %s3014 = smul.addr %s3010, 128
          %s3015 = scalar_lea.hbm %s5, %s3014
          %s3016 = sshll.u32 %s3006, 4
          %s3017 = int_to_ptr.vmem [resolvable:$true] %s3016
          %3022 = dma.vmem_to_hbm [thread:$0]  %s3017, 2048, %s3015, %s3003, 128, 128, 8
        $region56: #{tpu_custom_call.1} parent=39 // pred_fallthru
          _
      $region40: #{tpu_custom_call.1} parent=5 // pred_fallthru
        _
      %p3023 = scmp.le.s32.totalorder 2, %s18
      // Predicated region
      $region57: #{tpu_custom_call.1} parent=5 // pred_check
        %p3024 = pneg %p3023
      $region58: #{tpu_custom_call.1} parent=5 // pred_check_branch
        %3026 = sbr.rel (%p3024) target = $region60
      $region59: #{tpu_custom_call.1} parent=5 // pred_region
        %s3027 = ssub.s32 %s18, 2
        // Predicated region
        $region61: #{tpu_custom_call.1} parent=59 // pred_check
          %p3028 = pneg %p157
        $region62: #{tpu_custom_call.1} parent=59 // pred_check_branch
          %3030 = sbr.rel (%p3028) target = $region64
        $region63: #{tpu_custom_call.1} parent=59 // pred_region
          %s3031 = sand.u32 %s142, 1
          %s3032 = scalar_lea.sflag [#allocation4], %s3031
          %s3033 = sand.u32 %s142, 1
          %s3034 = smul.addr %s3033, 128
          %s3035 = scalar_lea.vmem [#allocation8], %s3034
          %3036 = dma.done %s3032, 2048
        $region64: #{tpu_custom_call.1} parent=59 // pred_fallthru
          _
      $region60: #{tpu_custom_call.1} parent=5 // pred_fallthru
        _
    $region6: #{tpu_custom_call.1} parent=1 // loop_footer
      %s22 = sadd.s32 1, %s18
    $region7: #{tpu_custom_call.1} parent=1 // loop_footer_branch
      %17 = sbr.rel target = $region3
    $region8: #{tpu_custom_call.1} parent=1 // loop_exit
      _
    %3037 = vsyncpa [#allocation3], 1
    %s3038 = scalar_lea.sflag [#allocation3], 1
    %3039 = vsyncpa %s3038, 1
    %3040 = vsyncpa [#allocation6], 1
    %3041 = vsyncpa [#allocation4], 1
    %s3042 = scalar_lea.sflag [#allocation4], 1
    %3043 = vsyncpa %s3042, 1

</llo_original>
